<compile_context>
chip_gen: v6e
topology: v6e:2x2x1
jax: 0.10.0
libtpu: 0.0.40
codegen_flags: <defaults>
</compile_context>

<pallas_src>
import functools

import numpy as np
import jax
import jax.numpy as jnp
from jax import lax
from jax.experimental import pallas as pl
from jax.experimental.pallas import tpu as pltpu

# --------------------------------------------------------------------------- #
# Model constants (from the PyTorch module)
# --------------------------------------------------------------------------- #
N_TRAIN = 64          # dummy_train_x = ones(64, fc_out_dim)
FC_IN_DIM = 512
FC_HIDDEN = 256
FC_OUT_DIM = 128
HIDDEN = 64           # stand-in extractor node-MLP width

PAD = 128             # lane-dense padding for the GP cache / mean output slab
MEAN_COL = N_TRAIN    # column of the mean slab that holds the predictive mean
BIG = 1.0e30          # "infinite" squared distance for padded train columns
assert N_TRAIN < PAD and MEAN_COL < PAD and FC_OUT_DIM == PAD

# packed (8, FC_IN_DIM) f32 "rows" slab layout (one DMA for all small vectors)
ROW_BN, ROW_BG, ROW_B1, ROW_B2, ROW_INVLS, ROW_XSQ, ROW_PRELU = range(7)
ROWS_SUB = 8          # sublane-aligned row count


# --------------------------------------------------------------------------- #
# Fused kernel: feature extractor + fc head + exact-GP predictive posterior
# --------------------------------------------------------------------------- #
def dkl_fused_kernel(x_ref, wn_ref, wg_ref, w1_ref, w2_ref, rows_ref, gp_ref,
                     mean_ref, cov_ref, *,
                     n_nodes, outputscale, noise, mean_const):
    B = cov_ref.shape[0]
    BN = x_ref.shape[0]

    # ---- static views into the packed constant slabs (no data movement) ----
    bn = rows_ref[ROW_BN:ROW_BN + 1, 0:HIDDEN]          # (1, 64)
    bg = rows_ref[ROW_BG:ROW_BG + 1, 0:FC_IN_DIM]       # (1, 512)
    b1 = rows_ref[ROW_B1:ROW_B1 + 1, 0:FC_HIDDEN]       # (1, 256)
    b2 = rows_ref[ROW_B2:ROW_B2 + 1, 0:FC_OUT_DIM]      # (1, 128)
    invls = rows_ref[ROW_INVLS:ROW_INVLS + 1, 0:FC_OUT_DIM]   # (1, 128)
    xsq = rows_ref[ROW_XSQ:ROW_XSQ + 1, 0:PAD]          # (1, 128), pads hold BIG
    a_row = rows_ref[ROW_PRELU:ROW_PRELU + 1, 0:FC_HIDDEN]    # PReLU slope row

    xtr = gp_ref[0:PAD, :]                 # (128,128) ARD-scaled train pts (padded)
    kinv_aug = gp_ref[PAD:2 * PAD, :]      # (128,128) [Kinv | alpha | 0]

    # ---- GraphFeatureExtractor stand-in: per-node MLP + mean pool (MXU) ----
    h = jnp.dot(x_ref[...].astype(jnp.bfloat16), wn_ref[...],
                preferred_element_type=jnp.float32) + bn
    h = jnp.maximum(h, 0.0)                                  # f32 elementwise

    # pooling matrix built in-kernel from iotas (no per-call HBM transfer)
    row = lax.broadcasted_iota(jnp.int32, (B, BN), 0)
    col = lax.broadcasted_iota(jnp.int32, (B, BN), 1)
    in_graph = (col >= row * n_nodes) & (col < (row + 1) * n_nodes)
    pool = jnp.where(in_graph, 1.0 / n_nodes, 0.0).astype(jnp.bfloat16)

    pooled = jnp.dot(pool, h.astype(jnp.bfloat16),
                     preferred_element_type=jnp.float32)     # (B, HIDDEN)
    feats = jnp.dot(pooled.astype(jnp.bfloat16), wg_ref[...],
                    preferred_element_type=jnp.float32) + bg  # (B, 512)

    # ---- fc: Linear(512,256) -> PReLU -> Dropout(eval: id) -> Linear(256,128) ----
    z1 = jnp.dot(feats.astype(jnp.bfloat16), w1_ref[...],
                 preferred_element_type=jnp.float32) + b1
    z1 = jnp.where(z1 >= 0.0, z1, a_row * z1)                 # PReLU, f32 VPU
    z = jnp.dot(z1.astype(jnp.bfloat16), w2_ref[...],
                preferred_element_type=jnp.float32) + b2      # (B, 128)

    # ---- exact GP predictive posterior: ScaleKernel(ARD-RBF) + Gaussian noise ----
    zs = z * invls                                            # ARD-scaled test pts
    # cross Gram against the (PAD, D) padded scaled train set (pad rows are zero)
    zx = lax.dot_general(zs, xtr, (((1,), (1,)), ((), ())),
                         preferred_element_type=jnp.float32)  # (B, PAD)
    zz = lax.dot_general(zs, zs, (((1,), (1,)), ((), ())),
                         preferred_element_type=jnp.float32)  # (B, B)

    rb = lax.broadcasted_iota(jnp.int32, (B, B), 0)
    cb = lax.broadcasted_iota(jnp.int32, (B, B), 1)
    diag = rb == cb
    zz_diag = jnp.where(diag, zz, 0.0)
    z_sq_col = jnp.sum(zz_diag, axis=1, keepdims=True)        # (B, 1) = ||zs_i||^2
    z_sq_row = jnp.sum(zz_diag, axis=0, keepdims=True)        # (1, B)

    # test-train kernel; padded columns have xsq = BIG so exp() -> exactly 0
    d2_tx = jnp.maximum(z_sq_col + xsq - 2.0 * zx, 0.0)
    k_tx = outputscale * jnp.exp(-0.5 * d2_tx)                # (B, PAD)

    # test-test kernel; force d2 diagonal to exactly 0 (insurance vs. cancellation)
    d2_tt = jnp.maximum(z_sq_col + z_sq_row - 2.0 * zz, 0.0)
    d2_tt = jnp.where(diag, 0.0, d2_tt)
    k_tt = outputscale * jnp.exp(-0.5 * d2_tt)                # (B, B)

    # one MXU pass against [Kinv | alpha | 0]: columns 0..M-1 = K_tx @ Kinv,
    # column M = K_tx @ alpha (predictive mean minus the constant).
    tmp_aug = jnp.dot(k_tx, kinv_aug,
                      preferred_element_type=jnp.float32)     # (B, PAD)
    mean_ref[...] = tmp_aug + mean_const                      # lane-dense slab store

    # quad = (K_tx Kinv) K_tx^T ; padded/alpha columns of k_tx are exactly 0,
    # so contracting over all PAD lanes is exact.
    quad = lax.dot_general(tmp_aug, k_tx, (((1,), (1,)), ((), ())),
                           preferred_element_type=jnp.float32)  # (B, B)
    cov_ref[...] = k_tt - quad + noise * diag.astype(jnp.float32)


# --------------------------------------------------------------------------- #
# Deterministic parameter setup (glue)
# --------------------------------------------------------------------------- #
def _softplus(x):
    return float(np.log1p(np.exp(x)))


def _linear_init(key, fan_in, fan_out):
    k1, k2 = jax.random.split(key)
    bound = 1.0 / np.sqrt(fan_in)
    w = jax.random.uniform(k1, (fan_in, fan_out), jnp.float32, -bound, bound)
    b = jax.random.uniform(k2, (fan_out,), jnp.float32, -bound, bound)
    return w, b


def init_params(key, node_dim):
    ks = jax.random.split(key, 4)
    Wn, bn = _linear_init(ks[0], node_dim, HIDDEN)
    Wg, bg = _linear_init(ks[1], HIDDEN, FC_IN_DIM)
    W1, b1 = _linear_init(ks[2], FC_IN_DIM, FC_HIDDEN)
    W2, b2 = _linear_init(ks[3], FC_HIDDEN, FC_OUT_DIM)

    # gpytorch-style defaults (raw param 0 -> softplus); use_ard=True (128 dims),
    # use_lengthscale_prior=False; GaussianLikelihood noise floor 1e-4.
    return dict(
        Wn=Wn, bn=bn, Wg=Wg, bg=bg, W1=W1, b1=b1, W2=W2, b2=b2,
        prelu_a=0.25,                         # nn.PReLU default
        lengthscale=_softplus(0.0),
        outputscale=_softplus(0.0),
        noise=_softplus(0.0) + 1e-4,
        mean_const=0.0,                       # ConstantMean default
    )


def build_kernel_consts(params):
    """One-time GP training-data cache + packed, lane/sublane-dense operands."""
    inv_ls = 1.0 / params["lengthscale"]

    # dummy training data from __create_tail_GP: ones(64, 128) / ones(64)
    Xtr = jnp.ones((N_TRAIN, FC_OUT_DIM), jnp.float32)
    ytr = jnp.ones((N_TRAIN,), jnp.float32)

    Xs = Xtr * inv_ls                                         # ARD-scaled train pts
    x_sq = jnp.sum(Xs * Xs, axis=1)                           # (M,)
    d2 = jnp.maximum(x_sq[:, None] + x_sq[None, :] - 2.0 * (Xs @ Xs.T), 0.0)
    Kxx = (params["outputscale"] * jnp.exp(-0.5 * d2)
           + params["noise"] * jnp.eye(N_TRAIN, dtype=jnp.float32))

    # TODO(synk): the 64x64 train-system factorization stays in plain JAX glue
    # (one-time cache); Cholesky solve instead of inv() for numerical stability.
    L = jnp.linalg.cholesky(Kxx)
    Kinv = jax.scipy.linalg.cho_solve((L, True),
                                      jnp.eye(N_TRAIN, dtype=jnp.float32))
    Kinv = 0.5 * (Kinv + Kinv.T)
    alpha = jax.scipy.linalg.cho_solve(
        (L, True), (ytr - params["mean_const"])[:, None])[:, 0]

    # single (2*PAD, 128) f32 GP-constant slab: [scaled train pts ; Kinv|alpha|0]
    gp_const = jnp.zeros((2 * PAD, FC_OUT_DIM), jnp.float32)
    gp_const = gp_const.at[:N_TRAIN, :].set(Xs)
    gp_const = gp_const.at[PAD:PAD + N_TRAIN, :N_TRAIN].set(Kinv)
    gp_const = gp_const.at[PAD:PAD + N_TRAIN, MEAN_COL].set(alpha)

    # single (8, 512) f32 "rows" slab for every small vector / scalar constant
    rows = np.zeros((ROWS_SUB, FC_IN_DIM), np.float32)
    rows[ROW_BN, :HIDDEN] = np.asarray(params["bn"])
    rows[ROW_BG, :FC_IN_DIM] = np.asarray(params["bg"])
    rows[ROW_B1, :FC_HIDDEN] = np.asarray(params["b1"])
    rows[ROW_B2, :FC_OUT_DIM] = np.asarray(params["b2"])
    rows[ROW_INVLS, :FC_OUT_DIM] = inv_ls
    rows[ROW_XSQ, :PAD] = BIG                       # padded train cols -> exp()=0
    rows[ROW_XSQ, :N_TRAIN] = np.asarray(x_sq)
    rows[ROW_PRELU, :FC_HIDDEN] = params["prelu_a"]

    return dict(
        # MXU operands in bf16 (v6e/v7x fast path, half the weight DMA bytes);
        # all packed constants / elementwise math stay f32 (v5e-safe, GP accuracy).
        Wn=params["Wn"].astype(jnp.bfloat16),
        Wg=params["Wg"].astype(jnp.bfloat16),
        W1=params["W1"].astype(jnp.bfloat16),
        W2=params["W2"].astype(jnp.bfloat16),
        rows=jnp.asarray(rows),
        gp_const=gp_const,
        outputscale=float(params["outputscale"]),
        noise=float(params["noise"]),
        mean_const=float(params["mean_const"]),
    )


# --------------------------------------------------------------------------- #
# Full forward (eval path of DKLModel.forward)
# --------------------------------------------------------------------------- #
def dkl_forward(node_attr, edge_attr, target, consts, train=False):
    # TODO(synk): training branch (set_train_data + non-likelihood logits) not
    # implemented; only the eval path (training=False, train=False) is covered.
    assert not train, "only the eval branch is implemented"
    del edge_attr, target  # unused in the eval path / stand-in extractor

    B, N, node_dim = node_attr.shape
    x_flat = node_attr.reshape(B * N, node_dim)               # glue reshape

    kernel = functools.partial(
        dkl_fused_kernel, n_nodes=N,
        outputscale=consts["outputscale"],
        noise=consts["noise"],
        mean_const=consts["mean_const"])

    vmem = lambda: pl.BlockSpec(memory_space=pltpu.MemorySpace.VMEM)

    # Total VMEM footprint < 1 MiB at these sizes (fits all of v5e/v6e/v7x).
    # If B or N_TRAIN grow, add a batch grid axis (parallel, for v7x's 2 TCs) and
    # tile K(z,X) as (TILE_B, M) blocks, accumulating the quad term.
    mean_slab, cov = pl.pallas_call(
        kernel,
        out_shape=(jax.ShapeDtypeStruct((B, PAD), jnp.float32),
                   jax.ShapeDtypeStruct((B, B), jnp.float32)),
        in_specs=[vmem() for _ in range(7)],
        out_specs=(vmem(), vmem()),
    )(x_flat, consts["Wn"], consts["Wg"], consts["W1"], consts["W2"],
      consts["rows"], consts["gp_const"])

    mean = mean_slab[:, MEAN_COL]                  # predictive mean (B,)
    cov = 0.5 * (cov + cov.T)                      # cheap symmetrization (insurance)
    return mean, cov                               # MVN(mean, cov)


# --------------------------------------------------------------------------- #
if __name__ == "__main__":
    B, N_NODES, NODE_DIM, EDGE_DIM = 8, 16, 16, 8   # B*N_NODES = 128 (lane-aligned)

    key = jax.random.PRNGKey(0)
    k_param, k_node, k_edge = jax.random.split(key, 3)

    params = init_params(k_param, NODE_DIM)
    consts = build_kernel_consts(params)

    node_attr = jax.random.normal(k_node, (B, N_NODES, NODE_DIM), jnp.float32)
    edge_attr = jax.random.normal(k_edge, (B, N_NODES, EDGE_DIM), jnp.float32)
    target = jnp.zeros((B,), jnp.float32)           # unused in eval branch

    mean, cov = dkl_forward(node_attr, edge_attr, target, consts, train=False)
    jax.block_until_ready((mean, cov))
    assert mean.shape == (B,) and cov.shape == (B, B)
    assert bool(jnp.all(jnp.isfinite(mean))) and bool(jnp.all(jnp.isfinite(cov)))
    print("KERNEL_OK")
</pallas_src>

<mosaic_0001>
module attributes {stable_mosaic.version = 11 : i64} {
  func.func @dkl_fused_kernel(%arg0: memref<128x16xf32, #tpu.memory_space<vmem>>, %arg1: memref<16x64xbf16, #tpu.memory_space<vmem>>, %arg2: memref<64x512xbf16, #tpu.memory_space<vmem>>, %arg3: memref<512x256xbf16, #tpu.memory_space<vmem>>, %arg4: memref<256x128xbf16, #tpu.memory_space<vmem>>, %arg5: memref<8x512xf32, #tpu.memory_space<vmem>>, %arg6: memref<256x128xf32, #tpu.memory_space<vmem>>, %arg7: memref<8x128xf32, #tpu.memory_space<vmem>>, %arg8: memref<8x8xf32, #tpu.memory_space<vmem>>) attributes {dimension_semantics = [], scalar_prefetch = 0 : i64, scratch_operands = 0 : i64, tpu.core_type = #tpu.core_type<tc>} {
    %c0 = arith.constant 0 : index
    %c0_0 = arith.constant 0 : index
    %0 = vector.load %arg5[%c0, %c0_0] : memref<8x512xf32, #tpu.memory_space<vmem>>, vector<1x64xf32>
    %c1 = arith.constant 1 : index
    %c0_1 = arith.constant 0 : index
    %1 = vector.load %arg5[%c1, %c0_1] : memref<8x512xf32, #tpu.memory_space<vmem>>, vector<1x512xf32>
    %c2 = arith.constant 2 : index
    %c0_2 = arith.constant 0 : index
    %2 = vector.load %arg5[%c2, %c0_2] : memref<8x512xf32, #tpu.memory_space<vmem>>, vector<1x256xf32>
    %c3 = arith.constant 3 : index
    %c0_3 = arith.constant 0 : index
    %3 = vector.load %arg5[%c3, %c0_3] : memref<8x512xf32, #tpu.memory_space<vmem>>, vector<1x128xf32>
    %c4 = arith.constant 4 : index
    %c0_4 = arith.constant 0 : index
    %4 = vector.load %arg5[%c4, %c0_4] : memref<8x512xf32, #tpu.memory_space<vmem>>, vector<1x128xf32>
    %c5 = arith.constant 5 : index
    %c0_5 = arith.constant 0 : index
    %5 = vector.load %arg5[%c5, %c0_5] : memref<8x512xf32, #tpu.memory_space<vmem>>, vector<1x128xf32>
    %c6 = arith.constant 6 : index
    %c0_6 = arith.constant 0 : index
    %6 = vector.load %arg5[%c6, %c0_6] : memref<8x512xf32, #tpu.memory_space<vmem>>, vector<1x256xf32>
    %c0_7 = arith.constant 0 : index
    %c0_8 = arith.constant 0 : index
    %7 = vector.load %arg6[%c0_7, %c0_8] : memref<256x128xf32, #tpu.memory_space<vmem>>, vector<128x128xf32>
    %c128 = arith.constant 128 : index
    %c0_9 = arith.constant 0 : index
    %8 = vector.load %arg6[%c128, %c0_9] : memref<256x128xf32, #tpu.memory_space<vmem>>, vector<128x128xf32>
    %c0_10 = arith.constant 0 : index
    %c0_11 = arith.constant 0 : index
    %9 = vector.load %arg0[%c0_10, %c0_11] : memref<128x16xf32, #tpu.memory_space<vmem>>, vector<128x16xf32>
    %10 = arith.truncf %9 : vector<128x16xf32> to vector<128x16xbf16>
    %c0_12 = arith.constant 0 : index
    %c0_13 = arith.constant 0 : index
    %11 = vector.load %arg1[%c0_12, %c0_13] : memref<16x64xbf16, #tpu.memory_space<vmem>>, vector<16x64xbf16>
    %cst = arith.constant dense<0.000000e+00> : vector<128x64xf32>
    %12 = tpu.matmul %10, %11, %cst {dimension_numbers = #tpu.dot_dimension_numbers<[1], [0], [0], [1], [0, 0, 1, 1], [], []>} : vector<128x16xbf16>, vector<16x64xbf16>, vector<128x64xf32> -> vector<128x64xf32>
    %13 = vector.broadcast %0 : vector<1x64xf32> to vector<128x64xf32>
    %14 = arith.addf %12, %13 : vector<128x64xf32>
    %cst_14 = arith.constant 0.000000e+00 : f32
    %15 = vector.broadcast %cst_14 : f32 to vector<128x64xf32>
    %16 = arith.maximumf %14, %15 : vector<128x64xf32>
    %17 = tpu.iota {dimensions = array<i32: 0>} : vector<8x128xi32>
    %18 = tpu.iota {dimensions = array<i32: 1>} : vector<8x128xi32>
    %c16_i32 = arith.constant 16 : i32
    %19 = vector.broadcast %c16_i32 : i32 to vector<8x128xi32>
    %20 = arith.muli %17, %19 : vector<8x128xi32>
    %21 = arith.cmpi sge, %18, %20 : vector<8x128xi32>
    %c1_i32 = arith.constant 1 : i32
    %22 = vector.broadcast %c1_i32 : i32 to vector<8x128xi32>
    %23 = arith.addi %17, %22 : vector<8x128xi32>
    %c16_i32_15 = arith.constant 16 : i32
    %24 = vector.broadcast %c16_i32_15 : i32 to vector<8x128xi32>
    %25 = arith.muli %23, %24 : vector<8x128xi32>
    %26 = arith.cmpi slt, %18, %25 : vector<8x128xi32>
    %27 = arith.andi %21, %26 : vector<8x128xi1>
    %cst_16 = arith.constant 6.250000e-02 : f32
    %cst_17 = arith.constant 0.000000e+00 : f32
    %28 = vector.broadcast %cst_16 : f32 to vector<8x128xf32>
    %29 = vector.broadcast %cst_17 : f32 to vector<8x128xf32>
    %30 = arith.select %27, %28, %29 : vector<8x128xi1>, vector<8x128xf32>
    %31 = arith.truncf %30 : vector<8x128xf32> to vector<8x128xbf16>
    %32 = arith.truncf %16 : vector<128x64xf32> to vector<128x64xbf16>
    %cst_18 = arith.constant dense<0.000000e+00> : vector<8x64xf32>
    %33 = tpu.matmul %31, %32, %cst_18 {dimension_numbers = #tpu.dot_dimension_numbers<[1], [0], [0], [1], [0, 0, 1, 1], [], []>} : vector<8x128xbf16>, vector<128x64xbf16>, vector<8x64xf32> -> vector<8x64xf32>
    %34 = arith.truncf %33 : vector<8x64xf32> to vector<8x64xbf16>
    %c0_19 = arith.constant 0 : index
    %c0_20 = arith.constant 0 : index
    %35 = vector.load %arg2[%c0_19, %c0_20] : memref<64x512xbf16, #tpu.memory_space<vmem>>, vector<64x512xbf16>
    %cst_21 = arith.constant dense<0.000000e+00> : vector<8x512xf32>
    %36 = tpu.matmul %34, %35, %cst_21 {dimension_numbers = #tpu.dot_dimension_numbers<[1], [0], [0], [1], [0, 0, 1, 1], [], []>} : vector<8x64xbf16>, vector<64x512xbf16>, vector<8x512xf32> -> vector<8x512xf32>
    %37 = vector.broadcast %1 : vector<1x512xf32> to vector<8x512xf32>
    %38 = arith.addf %36, %37 : vector<8x512xf32>
    %39 = arith.truncf %38 : vector<8x512xf32> to vector<8x512xbf16>
    %c0_22 = arith.constant 0 : index
    %c0_23 = arith.constant 0 : index
    %40 = vector.load %arg3[%c0_22, %c0_23] : memref<512x256xbf16, #tpu.memory_space<vmem>>, vector<512x256xbf16>
    %cst_24 = arith.constant dense<0.000000e+00> : vector<8x256xf32>
    %41 = tpu.matmul %39, %40, %cst_24 {dimension_numbers = #tpu.dot_dimension_numbers<[1], [0], [0], [1], [0, 0, 1, 1], [], []>} : vector<8x512xbf16>, vector<512x256xbf16>, vector<8x256xf32> -> vector<8x256xf32>
    %42 = vector.broadcast %2 : vector<1x256xf32> to vector<8x256xf32>
    %43 = arith.addf %41, %42 : vector<8x256xf32>
    %cst_25 = arith.constant 0.000000e+00 : f32
    %44 = vector.broadcast %cst_25 : f32 to vector<8x256xf32>
    %45 = arith.cmpf oge, %43, %44 : vector<8x256xf32>
    %46 = vector.broadcast %6 : vector<1x256xf32> to vector<8x256xf32>
    %47 = arith.mulf %46, %43 : vector<8x256xf32>
    %48 = arith.select %45, %43, %47 : vector<8x256xi1>, vector<8x256xf32>
    %49 = arith.truncf %48 : vector<8x256xf32> to vector<8x256xbf16>
    %c0_26 = arith.constant 0 : index
    %c0_27 = arith.constant 0 : index
    %50 = vector.load %arg4[%c0_26, %c0_27] : memref<256x128xbf16, #tpu.memory_space<vmem>>, vector<256x128xbf16>
    %cst_28 = arith.constant dense<0.000000e+00> : vector<8x128xf32>
    %51 = tpu.matmul %49, %50, %cst_28 {dimension_numbers = #tpu.dot_dimension_numbers<[1], [0], [0], [1], [0, 0, 1, 1], [], []>} : vector<8x256xbf16>, vector<256x128xbf16>, vector<8x128xf32> -> vector<8x128xf32>
    %52 = vector.broadcast %3 : vector<1x128xf32> to vector<8x128xf32>
    %53 = arith.addf %51, %52 : vector<8x128xf32>
    %54 = vector.broadcast %4 : vector<1x128xf32> to vector<8x128xf32>
    %55 = arith.mulf %53, %54 : vector<8x128xf32>
    %cst_29 = arith.constant dense<0.000000e+00> : vector<8x128xf32>
    %56 = tpu.matmul %55, %7, %cst_29 {dimension_numbers = #tpu.dot_dimension_numbers<[1], [1], [0], [0], [0, 0, 1, 0], [], []>} : vector<8x128xf32>, vector<128x128xf32>, vector<8x128xf32> -> vector<8x128xf32>
    %cst_30 = arith.constant dense<0.000000e+00> : vector<8x8xf32>
    %57 = tpu.matmul %55, %55, %cst_30 {dimension_numbers = #tpu.dot_dimension_numbers<[1], [1], [0], [0], [0, 0, 1, 0], [], []>} : vector<8x128xf32>, vector<8x128xf32>, vector<8x8xf32> -> vector<8x8xf32>
    %58 = tpu.iota {dimensions = array<i32: 0>} : vector<8x8xi32>
    %59 = tpu.iota {dimensions = array<i32: 1>} : vector<8x8xi32>
    %60 = arith.cmpi eq, %58, %59 : vector<8x8xi32>
    %cst_31 = arith.constant 0.000000e+00 : f32
    %61 = vector.broadcast %cst_31 : f32 to vector<8x8xf32>
    %62 = arith.select %60, %57, %61 : vector<8x8xi1>, vector<8x8xf32>
    %cst_32 = arith.constant dense<0.000000e+00> : vector<8xf32>
    %63 = vector.multi_reduction <add>, %62, %cst_32 [1] : vector<8x8xf32> to vector<8xf32>
    %64 = vector.shape_cast %63 : vector<8xf32> to vector<8x1xf32>
    %cst_33 = arith.constant dense<0.000000e+00> : vector<8xf32>
    %65 = vector.multi_reduction <add>, %62, %cst_33 [0] : vector<8x8xf32> to vector<8xf32>
    %66 = vector.shape_cast %65 : vector<8xf32> to vector<1x8xf32>
    %67 = vector.broadcast %64 : vector<8x1xf32> to vector<8x128xf32>
    %68 = vector.broadcast %5 : vector<1x128xf32> to vector<8x128xf32>
    %69 = arith.addf %67, %68 : vector<8x128xf32>
    %cst_34 = arith.constant 2.000000e+00 : f32
    %70 = vector.broadcast %cst_34 : f32 to vector<8x128xf32>
    %71 = arith.mulf %70, %56 : vector<8x128xf32>
    %72 = arith.subf %69, %71 : vector<8x128xf32>
    %cst_35 = arith.constant 0.000000e+00 : f32
    %73 = vector.broadcast %cst_35 : f32 to vector<8x128xf32>
    %74 = arith.maximumf %72, %73 : vector<8x128xf32>
    %cst_36 = arith.constant -5.000000e-01 : f32
    %75 = vector.broadcast %cst_36 : f32 to vector<8x128xf32>
    %76 = arith.mulf %75, %74 : vector<8x128xf32>
    %77 = math.exp %76 : vector<8x128xf32>
    %cst_37 = arith.constant 0.693147182 : f32
    %78 = vector.broadcast %cst_37 : f32 to vector<8x128xf32>
    %79 = arith.mulf %78, %77 : vector<8x128xf32>
    %80 = vector.broadcast %64 : vector<8x1xf32> to vector<8x8xf32>
    %81 = vector.broadcast %66 : vector<1x8xf32> to vector<8x8xf32>
    %82 = arith.addf %80, %81 : vector<8x8xf32>
    %cst_38 = arith.constant 2.000000e+00 : f32
    %83 = vector.broadcast %cst_38 : f32 to vector<8x8xf32>
    %84 = arith.mulf %83, %57 : vector<8x8xf32>
    %85 = arith.subf %82, %84 : vector<8x8xf32>
    %cst_39 = arith.constant 0.000000e+00 : f32
    %86 = vector.broadcast %cst_39 : f32 to vector<8x8xf32>
    %87 = arith.maximumf %85, %86 : vector<8x8xf32>
    %cst_40 = arith.constant 0.000000e+00 : f32
    %88 = vector.broadcast %cst_40 : f32 to vector<8x8xf32>
    %89 = arith.select %60, %88, %87 : vector<8x8xi1>, vector<8x8xf32>
    %cst_41 = arith.constant -5.000000e-01 : f32
    %90 = vector.broadcast %cst_41 : f32 to vector<8x8xf32>
    %91 = arith.mulf %90, %89 : vector<8x8xf32>
    %92 = math.exp %91 : vector<8x8xf32>
    %cst_42 = arith.constant 0.693147182 : f32
    %93 = vector.broadcast %cst_42 : f32 to vector<8x8xf32>
    %94 = arith.mulf %93, %92 : vector<8x8xf32>
    %cst_43 = arith.constant dense<0.000000e+00> : vector<8x128xf32>
    %95 = tpu.matmul %79, %8, %cst_43 {dimension_numbers = #tpu.dot_dimension_numbers<[1], [0], [0], [1], [0, 0, 1, 1], [], []>} : vector<8x128xf32>, vector<128x128xf32>, vector<8x128xf32> -> vector<8x128xf32>
    %cst_44 = arith.constant 0.000000e+00 : f32
    %96 = vector.broadcast %cst_44 : f32 to vector<8x128xf32>
    %97 = arith.addf %95, %96 : vector<8x128xf32>
    %c0_45 = arith.constant 0 : index
    %c0_46 = arith.constant 0 : index
    %98 = vector.load %arg7[%c0_45, %c0_46] : memref<8x128xf32, #tpu.memory_space<vmem>>, vector<8x128xf32>
    tpu.vector_store %arg7[%c0_45, %c0_46], %97 {strides = array<i32>} : memref<8x128xf32, #tpu.memory_space<vmem>>, vector<8x128xf32>,
    %cst_47 = arith.constant dense<0.000000e+00> : vector<8x8xf32>
    %99 = tpu.matmul %95, %79, %cst_47 {dimension_numbers = #tpu.dot_dimension_numbers<[1], [1], [0], [0], [0, 0, 1, 0], [], []>} : vector<8x128xf32>, vector<8x128xf32>, vector<8x8xf32> -> vector<8x8xf32>
    %100 = arith.subf %94, %99 : vector<8x8xf32>
    %101 = arith.extui %60 : vector<8x8xi1> to vector<8x8xi32>
    %102 = arith.sitofp %101 : vector<8x8xi32> to vector<8x8xf32>
    %cst_48 = arith.constant 0.693247199 : f32
    %103 = vector.broadcast %cst_48 : f32 to vector<8x8xf32>
    %104 = arith.mulf %103, %102 : vector<8x8xf32>
    %105 = arith.addf %100, %104 : vector<8x8xf32>
    %c0_49 = arith.constant 0 : index
    %c0_50 = arith.constant 0 : index
    %106 = vector.load %arg8[%c0_49, %c0_50] : memref<8x8xf32, #tpu.memory_space<vmem>>, vector<8x8xf32>
    tpu.vector_store %arg8[%c0_49, %c0_50], %105 {strides = array<i32>} : memref<8x8xf32, #tpu.memory_space<vmem>>, vector<8x8xf32>,
    return
  }
}

</mosaic_0001>

<llo_original>
// kernel: tpu_custom_call.1
$region0: #{tpu_custom_call.1}
  #allocation0 [shape = 'u32[]', space=smem, size = 0x4, offset = 0x4, fixed_abs, tag = 'smem constant byte address 0x4 - core index']
  #allocation1 [shape = 'u32[144,128]{1,0:T(1,128)}', space=vmem, size = 0x12000, scoped, tag = 'internal scratch']
  %s0 = inlined_call_operand.vmem [shape: f32[128,16], index: 0, kind: input, shape index: {}]
  %s1 = inlined_call_operand.vmem [shape: bf16[16,64], index: 1, kind: input, shape index: {}]
  %s2 = inlined_call_operand.vmem [shape: bf16[64,512], index: 2, kind: input, shape index: {}]
  %s3 = inlined_call_operand.hbm [shape: bf16[512,256], index: 3, kind: input, shape index: {}]
  %s4 = inlined_call_operand.hbm [shape: bf16[256,128], index: 4, kind: input, shape index: {}]
  %s5 = inlined_call_operand.hbm [shape: f32[8,512], index: 5, kind: input, shape index: {}]
  %s6 = inlined_call_operand.hbm [shape: f32[256,128], index: 6, kind: input, shape index: {}]
  %s7 = inlined_call_operand.hbm [shape: f32[8,128], index: 7, kind: output, shape index: {0}]
  %s8 = inlined_call_operand.hbm [shape: f32[8,8], index: 8, kind: output, shape index: {1}]
  %9 = xla_tuple %s7, %s8
  %s10 = sld [smem:[#allocation0]]
  $region62: #{tpu_custom_call.1} parent=0
    _
  %s12 = ssub.s32 1, %s10
  %s13 = scalar_select 0, %s12, %s10
  $region1: #{tpu_custom_call.1} parent=0
    #allocation2 [shape = 'u8[262144]{0}', space=vmem, size = 0x40000, scoped, tag = 'input window, operand 3, single buffered']
    #allocation3 [shape = 's32[1]{0}', space=sflag, size = 0x4, scoped, tag = 'scoped memory for tpu_custom_call.1']
    #allocation4 [shape = 's32[1]{0}', space=sflag, size = 0x4, scoped, tag = 'scoped memory for tpu_custom_call.1']
    #allocation5 [shape = 'u8[65536]{0}', space=vmem, size = 0x10000, scoped, tag = 'input window, operand 4, single buffered']
    #allocation6 [shape = 's32[1]{0}', space=sflag, size = 0x4, scoped, tag = 'scoped memory for tpu_custom_call.1']
    #allocation7 [shape = 'u8[16384]{0}', space=vmem, size = 0x4000, scoped, tag = 'input window, operand 5, single buffered']
    #allocation8 [shape = 'u8[131072]{0}', space=vmem, size = 0x20000, scoped, tag = 'input window, operand 6, single buffered']
    #allocation9 [shape = 's32[1]{0}', space=sflag, size = 0x4, scoped, tag = 'scoped memory for tpu_custom_call.1']
    #allocation10 [shape = 'u8[4096]{0}', space=vmem, size = 0x1000, scoped, tag = 'output window, operand 0, single buffered']
    #allocation11 [shape = 'u8[4096]{0}', space=vmem, size = 0x1000, scoped, tag = 'output window, operand 1, single buffered']
    #allocation12 [shape = 's32[1]{0}', space=sflag, size = 0x4, scoped, tag = 'scoped memory for tpu_custom_call.1']
    %14 = vsyncpa [#allocation3], 0
    %15 = vsyncpa [#allocation6], 0
    %16 = vsyncpa [#allocation9], 0
    %17 = vsyncpa [#allocation4], 0
    %18 = vsyncpa [#allocation12], 0
    // Predicated region
    $region2: #{tpu_custom_call.1} parent=1 // pred_check
      _
    $region3: #{tpu_custom_call.1} parent=1 // pred_check_branch
      %20 = sbr.rel (0) target = $region5
    $region4: #{tpu_custom_call.1} parent=1 // pred_region
      _
    $region5: #{tpu_custom_call.1} parent=1 // pred_fallthru
      _
    // Predicated region
    $region6: #{tpu_custom_call.1} parent=1 // pred_check
      _
    $region7: #{tpu_custom_call.1} parent=1 // pred_check_branch
      %22 = sbr.rel (0) target = $region9
    $region8: #{tpu_custom_call.1} parent=1 // pred_region
      _
    $region9: #{tpu_custom_call.1} parent=1 // pred_fallthru
      _
    // Predicated region
    $region10: #{tpu_custom_call.1} parent=1 // pred_check
      _
    $region11: #{tpu_custom_call.1} parent=1 // pred_check_branch
      %24 = sbr.rel (0) target = $region13
    $region12: #{tpu_custom_call.1} parent=1 // pred_region
      _
    $region13: #{tpu_custom_call.1} parent=1 // pred_fallthru
      _
    // Predicated region
    $region14: #{tpu_custom_call.1} parent=1 // pred_check
      _
    $region15: #{tpu_custom_call.1} parent=1 // pred_check_branch
      %26 = sbr.rel (0) target = $region17
    $region16: #{tpu_custom_call.1} parent=1 // pred_region
      %s28 = ssub.s32 8192, 8192
      %29 = vsyncadd [#allocation3], %s28
      %s30 = sshll.u32 [#allocation2], 4
      %s31 = int_to_ptr.vmem [resolvable:$true] %s30
      %36 = dma.hbm_to_vmem [thread:$0]  %s3, 8192, %s31, [#allocation3], 128, 128, 8
    $region17: #{tpu_custom_call.1} parent=1 // pred_fallthru
      _
    // Predicated region
    $region18: #{tpu_custom_call.1} parent=1 // pred_check
      _
    $region19: #{tpu_custom_call.1} parent=1 // pred_check_branch
      %38 = sbr.rel (0) target = $region21
    $region20: #{tpu_custom_call.1} parent=1 // pred_region
      %s40 = ssub.s32 2048, 2048
      %41 = vsyncadd [#allocation6], %s40
      %s42 = sshll.u32 [#allocation5], 4
      %s43 = int_to_ptr.vmem [resolvable:$true] %s42
      %48 = dma.hbm_to_vmem [thread:$0]  %s4, 2048, %s43, [#allocation6], 64, 64, 4
    $region21: #{tpu_custom_call.1} parent=1 // pred_fallthru
      _
    // Predicated region
    $region22: #{tpu_custom_call.1} parent=1 // pred_check
      _
    $region23: #{tpu_custom_call.1} parent=1 // pred_check_branch
      %50 = sbr.rel (0) target = $region25
    $region24: #{tpu_custom_call.1} parent=1 // pred_region
      %s52 = ssub.s32 512, 512
      %53 = vsyncadd [#allocation6], %s52
      %s55 = sshll.u32 [#allocation7], 4
      %s56 = int_to_ptr.vmem [resolvable:$true] %s55
      %58 = dma.hbm_to_vmem [thread:$0]  %s5, 512, %s56, [#allocation6]
    $region25: #{tpu_custom_call.1} parent=1 // pred_fallthru
      _
    // Predicated region
    $region26: #{tpu_custom_call.1} parent=1 // pred_check
      _
    $region27: #{tpu_custom_call.1} parent=1 // pred_check_branch
      %60 = sbr.rel (0) target = $region29
    $region28: #{tpu_custom_call.1} parent=1 // pred_region
      %s62 = ssub.s32 4096, 4096
      %63 = vsyncadd [#allocation9], %s62
      %s64 = sshll.u32 [#allocation8], 4
      %s65 = int_to_ptr.vmem [resolvable:$true] %s64
      %70 = dma.hbm_to_vmem [thread:$0]  %s6, 4096, %s65, [#allocation9], 128, 128, 8
    $region29: #{tpu_custom_call.1} parent=1 // pred_fallthru
      _
    // Predicated region
    $region30: #{tpu_custom_call.1} parent=1 // pred_check
      _
    $region31: #{tpu_custom_call.1} parent=1 // pred_check_branch
      %72 = sbr.rel (0) target = $region33
    $region32: #{tpu_custom_call.1} parent=1 // pred_region
      %73 = dma.done [#allocation3], 8192
    $region33: #{tpu_custom_call.1} parent=1 // pred_fallthru
      _
    // Predicated region
    $region34: #{tpu_custom_call.1} parent=1 // pred_check
      _
    $region35: #{tpu_custom_call.1} parent=1 // pred_check_branch
      %75 = sbr.rel (0) target = $region37
    $region36: #{tpu_custom_call.1} parent=1 // pred_region
      %76 = dma.done [#allocation6], 2048
    $region37: #{tpu_custom_call.1} parent=1 // pred_fallthru
      _
    // Predicated region
    $region38: #{tpu_custom_call.1} parent=1 // pred_check
      _
    $region39: #{tpu_custom_call.1} parent=1 // pred_check_branch
      %78 = sbr.rel (0) target = $region41
    $region40: #{tpu_custom_call.1} parent=1 // pred_region
      %79 = dma.done [#allocation6], 512
    $region41: #{tpu_custom_call.1} parent=1 // pred_fallthru
      _
    // Predicated region
    $region42: #{tpu_custom_call.1} parent=1 // pred_check
      _
    $region43: #{tpu_custom_call.1} parent=1 // pred_check_branch
      %81 = sbr.rel (0) target = $region45
    $region44: #{tpu_custom_call.1} parent=1 // pred_region
      %82 = dma.done [#allocation9], 4096
    $region45: #{tpu_custom_call.1} parent=1 // pred_fallthru
      _
    %v84 = vld [vmem:[#allocation7] ss:$0 sm:$0xff]
    %s85 = scalar_lea.vmem [#allocation7], 1
    %v86 = vld [vmem:[%s85] ss:$8 sm:$0xf]
    %s87 = scalar_lea.vmem [#allocation7], 2
    %v88 = vld [vmem:[%s87] ss:$8 sm:$0x3]
    %v89 = vld [vmem:[#allocation7 + $0x3] ss:$0 sm:$0xff]
    %v90 = vld [vmem:[#allocation7 + $0x4] ss:$0 sm:$0xff]
    %v91 = vld [vmem:[#allocation7 + $0x5] ss:$0 sm:$0xff]
    %s92 = scalar_lea.vmem [#allocation7], 6
    %v93 = vld [vmem:[%s92] ss:$8 sm:$0x3]
    %v94 = vld [vmem:[#allocation8] sm:$0xff]
    %v95 = vld [vmem:[#allocation8 + $0x8] sm:$0xff]
    %v96 = vld [vmem:[#allocation8 + $0x10] sm:$0xff]
    %v97 = vld [vmem:[#allocation8 + $0x18] sm:$0xff]
    %v98 = vld [vmem:[#allocation8 + $0x20] sm:$0xff]
    %v99 = vld [vmem:[#allocation8 + $0x28] sm:$0xff]
    %v100 = vld [vmem:[#allocation8 + $0x30] sm:$0xff]
    %v101 = vld [vmem:[#allocation8 + $0x38] sm:$0xff]
    %v102 = vld [vmem:[#allocation8 + $0x40] sm:$0xff]
    %v103 = vld [vmem:[#allocation8 + $0x48] sm:$0xff]
    %v104 = vld [vmem:[#allocation8 + $0x50] sm:$0xff]
    %v105 = vld [vmem:[#allocation8 + $0x58] sm:$0xff]
    %v106 = vld [vmem:[#allocation8 + $0x60] sm:$0xff]
    %v107 = vld [vmem:[#allocation8 + $0x68] sm:$0xff]
    %v108 = vld [vmem:[#allocation8 + $0x70] sm:$0xff]
    %v109 = vld [vmem:[#allocation8 + $0x78] sm:$0xff]
    %v110 = vld [vmem:[#allocation8 + $0x80] sm:$0xff]
    %v111 = vld [vmem:[#allocation8 + $0x88] sm:$0xff]
    %v112 = vld [vmem:[#allocation8 + $0x90] sm:$0xff]
    %v113 = vld [vmem:[#allocation8 + $0x98] sm:$0xff]
    %v114 = vld [vmem:[#allocation8 + $0xa0] sm:$0xff]
    %v115 = vld [vmem:[#allocation8 + $0xa8] sm:$0xff]
    %v116 = vld [vmem:[#allocation8 + $0xb0] sm:$0xff]
    %v117 = vld [vmem:[#allocation8 + $0xb8] sm:$0xff]
    %v118 = vld [vmem:[#allocation8 + $0xc0] sm:$0xff]
    %v119 = vld [vmem:[#allocation8 + $0xc8] sm:$0xff]
    %v120 = vld [vmem:[#allocation8 + $0xd0] sm:$0xff]
    %v121 = vld [vmem:[#allocation8 + $0xd8] sm:$0xff]
    %v122 = vld [vmem:[#allocation8 + $0xe0] sm:$0xff]
    %v123 = vld [vmem:[#allocation8 + $0xe8] sm:$0xff]
    %v124 = vld [vmem:[#allocation8 + $0xf0] sm:$0xff]
    %v125 = vld [vmem:[#allocation8 + $0xf8] sm:$0xff]
    %v126 = vld [vmem:[%s0] sm:$0xff]
    %v127 = vld [vmem:[%s0 + $0x8] sm:$0xff]
    %v128 = vld [vmem:[%s0 + $0x10] sm:$0xff]
    %v129 = vld [vmem:[%s0 + $0x18] sm:$0xff]
    %v130 = vld [vmem:[%s0 + $0x20] sm:$0xff]
    %v131 = vld [vmem:[%s0 + $0x28] sm:$0xff]
    %v132 = vld [vmem:[%s0 + $0x30] sm:$0xff]
    %v133 = vld [vmem:[%s0 + $0x38] sm:$0xff]
    %v134 = vld [vmem:[%s0 + $0x40] sm:$0xff]
    %v135 = vld [vmem:[%s0 + $0x48] sm:$0xff]
    %v136 = vld [vmem:[%s0 + $0x50] sm:$0xff]
    %v137 = vld [vmem:[%s0 + $0x58] sm:$0xff]
    %v138 = vld [vmem:[%s0 + $0x60] sm:$0xff]
    %v139 = vld [vmem:[%s0 + $0x68] sm:$0xff]
    %v140 = vld [vmem:[%s0 + $0x70] sm:$0xff]
    %v141 = vld [vmem:[%s0 + $0x78] sm:$0xff]
    %v142 = vpack.c.bf16 %v127, %v126
    %v143 = vpack.c.bf16 %v129, %v128
    %v144 = vpack.c.bf16 %v131, %v130
    %v145 = vpack.c.bf16 %v133, %v132
    %v146 = vpack.c.bf16 %v135, %v134
    %v147 = vpack.c.bf16 %v137, %v136
    %v148 = vpack.c.bf16 %v139, %v138
    %v149 = vpack.c.bf16 %v141, %v140
    %v150 = vld [vmem:[%s1] sm:$0xf]
    %v151 = vld [vmem:[%s1 + $0x4] sm:$0xf]
    %v154 = vunpack.c.l.b16 %v150
    %v155 = vunpack.c.l.b16 %v151
    %v156 = vpack.c.b16 %v155, %v154
    %vm158 = vcmask 130048
    %v160 = vsel %vm158, %v142, 0
    %v163 = vsel %vm158, %v143, 0
    %v166 = vsel %vm158, %v144, 0
    %v169 = vsel %vm158, %v145, 0
    %v172 = vsel %vm158, %v146, 0
    %v175 = vsel %vm158, %v147, 0
    %v178 = vsel %vm158, %v148, 0
    %v181 = vsel %vm158, %v149, 0
    %183 = vmatprep.subr.bf16.mxu0 0
    %184 = vmatpush1.bf16.msra.mxu0 0
    %185 = vmatprep.subr.bf16.mxu0 0
    %186 = vmatpush1.bf16.msra.mxu0 0
    %187 = vmatprep.subr.bf16.mxu0 0
    %188 = vmatpush1.bf16.msra.mxu0 0
    %189 = vmatprep.subr.bf16.mxu0 0
    %190 = vmatpush1.bf16.msra.mxu0 0
    %191 = vmatprep.subr.bf16.mxu0 0
    %192 = vmatpush1.bf16.msra.mxu0 0
    %193 = vmatprep.subr.bf16.mxu0 0
    %194 = vmatpush1.bf16.msra.mxu0 0
    %195 = vmatprep.subr.bf16.mxu0 0
    %196 = vmatpush1.bf16.msra.mxu0 0
    %197 = vmatprep.subr.bf16.mxu0 0
    %198 = vmatpush1.bf16.msra.mxu0 %v156
    %199 = vmatprep.subr.bf16.mxu0 0
    %200 = vmatpush2.bf16.msra.mxu0 0
    %201 = vmatprep.subr.bf16.mxu0 0
    %202 = vmatpush2.bf16.msra.mxu0 0
    %203 = vmatprep.subr.bf16.mxu0 0
    %204 = vmatpush2.bf16.msra.mxu0 0
    %205 = vmatprep.subr.bf16.mxu0 0
    %206 = vmatpush2.bf16.msra.mxu0 0
    %207 = vmatprep.subr.bf16.mxu0 0
    %208 = vmatpush2.bf16.msra.mxu0 0
    %209 = vmatprep.subr.bf16.mxu0 0
    %210 = vmatpush2.bf16.msra.mxu0 0
    %211 = vmatprep.subr.bf16.mxu0 0
    %212 = vmatpush2.bf16.msra.mxu0 0
    %213 = vmatprep.subr.bf16.mxu0 0
    %214 = vmatpush2.bf16.msra.mxu0 0
    %215 = vmatprep.mubr.bf16.mxu0 0
    %216 = vmatmul.mubr.bf16.gmra.mxu0 %v160
    %v217 = vpop.f32.mrf.mxu0
    %v218 = vadd.f32 %v84, %v217
    %v219 = vpop.f32.mrf.mxu0
    %v220 = vpop.f32.mrf.mxu0
    %v221 = vadd.f32 %v84, %v220
    %v222 = vpop.f32.mrf.mxu0
    %223 = vmatprep.mubr.bf16.mxu0 0
    %224 = vmatmul.mubr.bf16.gmra.mxu0 %v163
    %v225 = vpop.f32.mrf.mxu0
    %v226 = vadd.f32 %v84, %v225
    %v227 = vpop.f32.mrf.mxu0
    %v228 = vpop.f32.mrf.mxu0
    %v229 = vadd.f32 %v84, %v228
    %v230 = vpop.f32.mrf.mxu0
    %231 = vmatprep.mubr.bf16.mxu0 0
    %232 = vmatmul.mubr.bf16.gmra.mxu0 %v166
    %v233 = vpop.f32.mrf.mxu0
    %v234 = vadd.f32 %v84, %v233
    %v235 = vpop.f32.mrf.mxu0
    %v236 = vpop.f32.mrf.mxu0
    %v237 = vadd.f32 %v84, %v236
    %v238 = vpop.f32.mrf.mxu0
    %239 = vmatprep.mubr.bf16.mxu0 0
    %240 = vmatmul.mubr.bf16.gmra.mxu0 %v169
    %v241 = vpop.f32.mrf.mxu0
    %v242 = vadd.f32 %v84, %v241
    %v243 = vpop.f32.mrf.mxu0
    %v244 = vpop.f32.mrf.mxu0
    %v245 = vadd.f32 %v84, %v244
    %v246 = vpop.f32.mrf.mxu0
    %247 = vmatprep.mubr.bf16.mxu0 0
    %248 = vmatmul.mubr.bf16.gmra.mxu0 %v172
    %v249 = vpop.f32.mrf.mxu0
    %v250 = vadd.f32 %v84, %v249
    %v251 = vpop.f32.mrf.mxu0
    %v252 = vpop.f32.mrf.mxu0
    %v253 = vadd.f32 %v84, %v252
    %v254 = vpop.f32.mrf.mxu0
    %255 = vmatprep.mubr.bf16.mxu0 0
    %256 = vmatmul.mubr.bf16.gmra.mxu0 %v175
    %v257 = vpop.f32.mrf.mxu0
    %v258 = vadd.f32 %v84, %v257
    %v259 = vpop.f32.mrf.mxu0
    %v260 = vpop.f32.mrf.mxu0
    %v261 = vadd.f32 %v84, %v260
    %v262 = vpop.f32.mrf.mxu0
    %263 = vmatprep.mubr.bf16.mxu0 0
    %264 = vmatmul.mubr.bf16.gmra.mxu0 %v178
    %v265 = vpop.f32.mrf.mxu0
    %v266 = vadd.f32 %v84, %v265
    %v267 = vpop.f32.mrf.mxu0
    %v268 = vpop.f32.mrf.mxu0
    %v269 = vadd.f32 %v84, %v268
    %v270 = vpop.f32.mrf.mxu0
    %271 = vmatprep.mubr.bf16.mxu0 0
    %272 = vmatmul.mubr.bf16.gmra.mxu0 %v181
    %v273 = vpop.f32.mrf.mxu0
    %v274 = vadd.f32 %v84, %v273
    %v275 = vpop.f32.mrf.mxu0
    %v276 = vpop.f32.mrf.mxu0
    %v277 = vadd.f32 %v84, %v276
    %v278 = vpop.f32.mrf.mxu0
    %279 = vdwg.mxu0
    %v280 = vmax.f32 %v218, 0.0
    %v281 = vmax.f32 %v221, 0.0
    %v282 = vmax.f32 %v226, 0.0
    %v283 = vmax.f32 %v229, 0.0
    %v284 = vmax.f32 %v234, 0.0
    %v285 = vmax.f32 %v237, 0.0
    %v286 = vmax.f32 %v242, 0.0
    %v287 = vmax.f32 %v245, 0.0
    %v288 = vmax.f32 %v250, 0.0
    %v289 = vmax.f32 %v253, 0.0
    %v290 = vmax.f32 %v258, 0.0
    %v291 = vmax.f32 %v261, 0.0
    %v292 = vmax.f32 %v266, 0.0
    %v293 = vmax.f32 %v269, 0.0
    %v294 = vmax.f32 %v274, 0.0
    %v295 = vmax.f32 %v277, 0.0
    %v296 = vlaneseq
    %v297 = vshrl.u32 %v296, 7
    %v298 = vlaneseq
    %v299 = vand.u32 %v298, 127
    %v300 = vmul.u32 %v297, 16
    %vm301 = vcmp.ge.s32.totalorder %v299, %v300
    %v302 = vadd.s32 %v297, 1
    %v303 = vmul.u32 %v302, 16
    %vm304 = vcmp.lt.s32.totalorder %v299, %v303
    %vm305 = vmand %vm301, %vm304
    %v306 = vsel %vm305, 0.0625, 0.0
    %v307 = vpack.c.bf16 %v306, %v306
    %v308 = vpack.c.bf16 %v281, %v280
    %v309 = vpack.c.bf16 %v283, %v282
    %v310 = vpack.c.bf16 %v285, %v284
    %v311 = vpack.c.bf16 %v287, %v286
    %v312 = vpack.c.bf16 %v289, %v288
    %v313 = vpack.c.bf16 %v291, %v290
    %v314 = vpack.c.bf16 %v293, %v292
    %v315 = vpack.c.bf16 %v295, %v294
    %316 = vmatprep.subr.bf16.mxu0 0
    %317 = vmatpush1.bf16.msra.mxu0 %v315
    %318 = vmatprep.subr.bf16.mxu0 0
    %319 = vmatpush1.bf16.msra.mxu0 %v314
    %320 = vmatprep.subr.bf16.mxu0 0
    %321 = vmatpush1.bf16.msra.mxu0 %v313
    %322 = vmatprep.subr.bf16.mxu0 0
    %323 = vmatpush1.bf16.msra.mxu0 %v312
    %324 = vmatprep.subr.bf16.mxu0 0
    %325 = vmatpush1.bf16.msra.mxu0 %v311
    %326 = vmatprep.subr.bf16.mxu0 0
    %327 = vmatpush1.bf16.msra.mxu0 %v310
    %328 = vmatprep.subr.bf16.mxu0 0
    %329 = vmatpush1.bf16.msra.mxu0 %v309
    %330 = vmatprep.subr.bf16.mxu0 0
    %331 = vmatpush1.bf16.msra.mxu0 %v308
    %332 = vmatprep.subr.bf16.mxu0 0
    %333 = vmatpush2.bf16.msra.mxu0 0
    %334 = vmatprep.subr.bf16.mxu0 0
    %335 = vmatpush2.bf16.msra.mxu0 0
    %336 = vmatprep.subr.bf16.mxu0 0
    %337 = vmatpush2.bf16.msra.mxu0 0
    %338 = vmatprep.subr.bf16.mxu0 0
    %339 = vmatpush2.bf16.msra.mxu0 0
    %340 = vmatprep.subr.bf16.mxu0 0
    %341 = vmatpush2.bf16.msra.mxu0 0
    %342 = vmatprep.subr.bf16.mxu0 0
    %343 = vmatpush2.bf16.msra.mxu0 0
    %344 = vmatprep.subr.bf16.mxu0 0
    %345 = vmatpush2.bf16.msra.mxu0 0
    %346 = vmatprep.subr.bf16.mxu0 0
    %347 = vmatpush2.bf16.msra.mxu0 0
    %348 = vmatprep.mubr.bf16.mxu0 0
    %349 = vmatmul.mubr.bf16.gmra.mxu0 %v307
    %v350 = vpop.f32.mrf.mxu0
    %v351 = vadd.f32 0.0, %v350
    %v352 = vpop.f32.mrf.mxu0
    %v353 = vpop.f32.mrf.mxu0
    %v354 = vpop.f32.mrf.mxu0
    %355 = vdwg.mxu0
    %v356 = vpack.c.bf16 %v351, %v351
    %v357 = vld [vmem:[%s2] sm:$0xff]
    %v358 = vld [vmem:[%s2 + $0x8] sm:$0xff]
    %v359 = vld [vmem:[%s2 + $0x10] sm:$0xff]
    %v360 = vld [vmem:[%s2 + $0x18] sm:$0xff]
    %v361 = vld [vmem:[%s2 + $0x20] sm:$0xff]
    %v362 = vld [vmem:[%s2 + $0x28] sm:$0xff]
    %v363 = vld [vmem:[%s2 + $0x30] sm:$0xff]
    %v364 = vld [vmem:[%s2 + $0x38] sm:$0xff]
    %v365 = vld [vmem:[%s2 + $0x40] sm:$0xff]
    %v366 = vld [vmem:[%s2 + $0x48] sm:$0xff]
    %v367 = vld [vmem:[%s2 + $0x50] sm:$0xff]
    %v368 = vld [vmem:[%s2 + $0x58] sm:$0xff]
    %v369 = vld [vmem:[%s2 + $0x60] sm:$0xff]
    %v370 = vld [vmem:[%s2 + $0x68] sm:$0xff]
    %v371 = vld [vmem:[%s2 + $0x70] sm:$0xff]
    %v372 = vld [vmem:[%s2 + $0x78] sm:$0xff]
    %v374 = vlaneseq
    %v375 = vshrl.u32 %v374, 7
    %v376 = vsub.s32 0, %v375
    %v377 = vrot.slane %v86, %v376
    %v378 = vlaneseq
    %v379 = vshrl.u32 %v378, 7
    %v380 = vsub.s32 1, %v379
    %v381 = vrot.slane %v86, %v380
    %v382 = vlaneseq
    %v383 = vshrl.u32 %v382, 7
    %v384 = vsub.s32 2, %v383
    %v385 = vrot.slane %v86, %v384
    %v386 = vlaneseq
    %v387 = vshrl.u32 %v386, 7
    %v388 = vsub.s32 3, %v387
    %v389 = vrot.slane %v86, %v388
    %v410 = vunpack.c.l.b16 %v357
    %v411 = vunpack.c.h.b16 %v357
    %v412 = vunpack.c.l.b16 %v358
    %v413 = vunpack.c.h.b16 %v358
    %v414 = vunpack.c.l.b16 %v359
    %v415 = vunpack.c.h.b16 %v359
    %v416 = vunpack.c.l.b16 %v360
    %v417 = vunpack.c.h.b16 %v360
    %v418 = vunpack.c.l.b16 %v361
    %v419 = vunpack.c.h.b16 %v361
    %v420 = vunpack.c.l.b16 %v362
    %v421 = vunpack.c.h.b16 %v362
    %v422 = vunpack.c.l.b16 %v363
    %v423 = vunpack.c.h.b16 %v363
    %v424 = vunpack.c.l.b16 %v364
    %v425 = vunpack.c.h.b16 %v364
    %v426 = vunpack.c.l.b16 %v365
    %v427 = vunpack.c.h.b16 %v365
    %v428 = vunpack.c.l.b16 %v366
    %v429 = vunpack.c.h.b16 %v366
    %v430 = vunpack.c.l.b16 %v367
    %v431 = vunpack.c.h.b16 %v367
    %v432 = vunpack.c.l.b16 %v368
    %v433 = vunpack.c.h.b16 %v368
    %v434 = vunpack.c.l.b16 %v369
    %v435 = vunpack.c.h.b16 %v369
    %v436 = vunpack.c.l.b16 %v370
    %v437 = vunpack.c.h.b16 %v370
    %v438 = vunpack.c.l.b16 %v371
    %v439 = vunpack.c.h.b16 %v371
    %v440 = vunpack.c.l.b16 %v372
    %v441 = vunpack.c.h.b16 %v372
    %v442 = vpack.c.b16 %v414, %v410
    %v443 = vpack.c.b16 %v415, %v411
    %v444 = vpack.c.b16 %v416, %v412
    %v445 = vpack.c.b16 %v417, %v413
    %v446 = vpack.c.b16 %v422, %v418
    %v447 = vpack.c.b16 %v423, %v419
    %v448 = vpack.c.b16 %v424, %v420
    %v449 = vpack.c.b16 %v425, %v421
    %v450 = vpack.c.b16 %v430, %v426
    %v451 = vpack.c.b16 %v431, %v427
    %v452 = vpack.c.b16 %v432, %v428
    %v453 = vpack.c.b16 %v433, %v429
    %v454 = vpack.c.b16 %v438, %v434
    %v455 = vpack.c.b16 %v439, %v435
    %v456 = vpack.c.b16 %v440, %v436
    %v457 = vpack.c.b16 %v441, %v437
    %vm474 = vcmask 523264
    %v476 = vsel %vm474, %v356, 0
    %478 = vmatprep.subr.bf16.mxu0 0
    %479 = vmatpush1.bf16.msra.mxu0 0
    %480 = vmatprep.subr.bf16.mxu0 0
    %481 = vmatpush1.bf16.msra.mxu0 0
    %482 = vmatprep.subr.bf16.mxu0 0
    %483 = vmatpush1.bf16.msra.mxu0 0
    %484 = vmatprep.subr.bf16.mxu0 0
    %485 = vmatpush1.bf16.msra.mxu0 0
    %486 = vmatprep.subr.bf16.mxu0 %v455
    %487 = vmatpush1.bf16.msra.mxu0 %v454
    %488 = vmatprep.subr.bf16.mxu0 %v451
    %489 = vmatpush1.bf16.msra.mxu0 %v450
    %490 = vmatprep.subr.bf16.mxu0 %v447
    %491 = vmatpush1.bf16.msra.mxu0 %v446
    %492 = vmatprep.subr.bf16.mxu0 %v443
    %493 = vmatpush1.bf16.msra.mxu0 %v442
    %494 = vmatprep.subr.bf16.mxu0 0
    %495 = vmatpush2.bf16.msra.mxu0 0
    %496 = vmatprep.subr.bf16.mxu0 0
    %497 = vmatpush2.bf16.msra.mxu0 0
    %498 = vmatprep.subr.bf16.mxu0 0
    %499 = vmatpush2.bf16.msra.mxu0 0
    %500 = vmatprep.subr.bf16.mxu0 0
    %501 = vmatpush2.bf16.msra.mxu0 0
    %502 = vmatprep.subr.bf16.mxu0 0
    %503 = vmatpush2.bf16.msra.mxu0 0
    %504 = vmatprep.subr.bf16.mxu0 0
    %505 = vmatpush2.bf16.msra.mxu0 0
    %506 = vmatprep.subr.bf16.mxu0 0
    %507 = vmatpush2.bf16.msra.mxu0 0
    %508 = vmatprep.subr.bf16.mxu0 0
    %509 = vmatpush2.bf16.msra.mxu0 0
    %510 = vmatprep.mubr.bf16.mxu0 0
    %511 = vmatmul.mubr.bf16.gmra.mxu0 %v476
    %v512 = vpop.f32.mrf.mxu0
    %v513 = vadd.f32 %v377, %v512
    %v514 = vpop.f32.mrf.mxu0
    %v515 = vadd.f32 %v381, %v514
    %v516 = vpop.f32.mrf.mxu0
    %v517 = vpop.f32.mrf.mxu0
    %518 = vdwg.mxu0
    %519 = vmatprep.subr.bf16.mxu0 0
    %520 = vmatpush1.bf16.msra.mxu0 0
    %521 = vmatprep.subr.bf16.mxu0 0
    %522 = vmatpush1.bf16.msra.mxu0 0
    %523 = vmatprep.subr.bf16.mxu0 0
    %524 = vmatpush1.bf16.msra.mxu0 0
    %525 = vmatprep.subr.bf16.mxu0 0
    %526 = vmatpush1.bf16.msra.mxu0 0
    %527 = vmatprep.subr.bf16.mxu0 %v457
    %528 = vmatpush1.bf16.msra.mxu0 %v456
    %529 = vmatprep.subr.bf16.mxu0 %v453
    %530 = vmatpush1.bf16.msra.mxu0 %v452
    %531 = vmatprep.subr.bf16.mxu0 %v449
    %532 = vmatpush1.bf16.msra.mxu0 %v448
    %533 = vmatprep.subr.bf16.mxu0 %v445
    %534 = vmatpush1.bf16.msra.mxu0 %v444
    %535 = vmatprep.subr.bf16.mxu0 0
    %536 = vmatpush2.bf16.msra.mxu0 0
    %537 = vmatprep.subr.bf16.mxu0 0
    %538 = vmatpush2.bf16.msra.mxu0 0
    %539 = vmatprep.subr.bf16.mxu0 0
    %540 = vmatpush2.bf16.msra.mxu0 0
    %541 = vmatprep.subr.bf16.mxu0 0
    %542 = vmatpush2.bf16.msra.mxu0 0
    %543 = vmatprep.subr.bf16.mxu0 0
    %544 = vmatpush2.bf16.msra.mxu0 0
    %545 = vmatprep.subr.bf16.mxu0 0
    %546 = vmatpush2.bf16.msra.mxu0 0
    %547 = vmatprep.subr.bf16.mxu0 0
    %548 = vmatpush2.bf16.msra.mxu0 0
    %549 = vmatprep.subr.bf16.mxu0 0
    %550 = vmatpush2.bf16.msra.mxu0 0
    %551 = vmatprep.mubr.bf16.mxu0 0
    %552 = vmatmul.mubr.bf16.gmra.mxu0 %v476
    %v553 = vpop.f32.mrf.mxu0
    %v554 = vadd.f32 %v385, %v553
    %v555 = vpop.f32.mrf.mxu0
    %v556 = vadd.f32 %v389, %v555
    %v557 = vpop.f32.mrf.mxu0
    %v558 = vpop.f32.mrf.mxu0
    %559 = vdwg.mxu0
    %v560 = vpack.c.bf16 %v513, %v513
    %v561 = vpack.c.bf16 %v515, %v515
    %v562 = vpack.c.bf16 %v554, %v554
    %v563 = vpack.c.bf16 %v556, %v556
    %v564 = vld [vmem:[#allocation2] sm:$0xff]
    %v565 = vld [vmem:[#allocation2 + $0x8] sm:$0xff]
    %v566 = vld [vmem:[#allocation2 + $0x10] sm:$0xff]
    %v567 = vld [vmem:[#allocation2 + $0x18] sm:$0xff]
    %v568 = vld [vmem:[#allocation2 + $0x20] sm:$0xff]
    %v569 = vld [vmem:[#allocation2 + $0x28] sm:$0xff]
    %v570 = vld [vmem:[#allocation2 + $0x30] sm:$0xff]
    %v571 = vld [vmem:[#allocation2 + $0x38] sm:$0xff]
    %v572 = vld [vmem:[#allocation2 + $0x40] sm:$0xff]
    %v573 = vld [vmem:[#allocation2 + $0x48] sm:$0xff]
    %v574 = vld [vmem:[#allocation2 + $0x50] sm:$0xff]
    %v575 = vld [vmem:[#allocation2 + $0x58] sm:$0xff]
    %v576 = vld [vmem:[#allocation2 + $0x60] sm:$0xff]
    %v577 = vld [vmem:[#allocation2 + $0x68] sm:$0xff]
    %v578 = vld [vmem:[#allocation2 + $0x70] sm:$0xff]
    %v579 = vld [vmem:[#allocation2 + $0x78] sm:$0xff]
    %v580 = vld [vmem:[#allocation2 + $0x80] sm:$0xff]
    %v581 = vld [vmem:[#allocation2 + $0x88] sm:$0xff]
    %v582 = vld [vmem:[#allocation2 + $0x90] sm:$0xff]
    %v583 = vld [vmem:[#allocation2 + $0x98] sm:$0xff]
    %v584 = vld [vmem:[#allocation2 + $0xa0] sm:$0xff]
    %v585 = vld [vmem:[#allocation2 + $0xa8] sm:$0xff]
    %v586 = vld [vmem:[#allocation2 + $0xb0] sm:$0xff]
    %v587 = vld [vmem:[#allocation2 + $0xb8] sm:$0xff]
    %v588 = vld [vmem:[#allocation2 + $0xc0] sm:$0xff]
    %v589 = vld [vmem:[#allocation2 + $0xc8] sm:$0xff]
    %v590 = vld [vmem:[#allocation2 + $0xd0] sm:$0xff]
    %v591 = vld [vmem:[#allocation2 + $0xd8] sm:$0xff]
    %v592 = vld [vmem:[#allocation2 + $0xe0] sm:$0xff]
    %v593 = vld [vmem:[#allocation2 + $0xe8] sm:$0xff]
    %v594 = vld [vmem:[#allocation2 + $0xf0] sm:$0xff]
    %v595 = vld [vmem:[#allocation2 + $0xf8] sm:$0xff]
    %v596 = vld [vmem:[#allocation2 + $0x100] sm:$0xff]
    %v597 = vld [vmem:[#allocation2 + $0x108] sm:$0xff]
    %v598 = vld [vmem:[#allocation2 + $0x110] sm:$0xff]
    %v599 = vld [vmem:[#allocation2 + $0x118] sm:$0xff]
    %v600 = vld [vmem:[#allocation2 + $0x120] sm:$0xff]
    %v601 = vld [vmem:[#allocation2 + $0x128] sm:$0xff]
    %v602 = vld [vmem:[#allocation2 + $0x130] sm:$0xff]
    %v603 = vld [vmem:[#allocation2 + $0x138] sm:$0xff]
    %v604 = vld [vmem:[#allocation2 + $0x140] sm:$0xff]
    %v605 = vld [vmem:[#allocation2 + $0x148] sm:$0xff]
    %v606 = vld [vmem:[#allocation2 + $0x150] sm:$0xff]
    %v607 = vld [vmem:[#allocation2 + $0x158] sm:$0xff]
    %v608 = vld [vmem:[#allocation2 + $0x160] sm:$0xff]
    %v609 = vld [vmem:[#allocation2 + $0x168] sm:$0xff]
    %v610 = vld [vmem:[#allocation2 + $0x170] sm:$0xff]
    %v611 = vld [vmem:[#allocation2 + $0x178] sm:$0xff]
    %v612 = vld [vmem:[#allocation2 + $0x180] sm:$0xff]
    %v613 = vld [vmem:[#allocation2 + $0x188] sm:$0xff]
    %v614 = vld [vmem:[#allocation2 + $0x190] sm:$0xff]
    %v615 = vld [vmem:[#allocation2 + $0x198] sm:$0xff]
    %v616 = vld [vmem:[#allocation2 + $0x1a0] sm:$0xff]
    %v617 = vld [vmem:[#allocation2 + $0x1a8] sm:$0xff]
    %v618 = vld [vmem:[#allocation2 + $0x1b0] sm:$0xff]
    %v619 = vld [vmem:[#allocation2 + $0x1b8] sm:$0xff]
    %v620 = vld [vmem:[#allocation2 + $0x1c0] sm:$0xff]
    %v621 = vld [vmem:[#allocation2 + $0x1c8] sm:$0xff]
    %v622 = vld [vmem:[#allocation2 + $0x1d0] sm:$0xff]
    %v623 = vld [vmem:[#allocation2 + $0x1d8] sm:$0xff]
    %v624 = vld [vmem:[#allocation2 + $0x1e0] sm:$0xff]
    %v625 = vld [vmem:[#allocation2 + $0x1e8] sm:$0xff]
    %v626 = vld [vmem:[#allocation2 + $0x1f0] sm:$0xff]
    %v627 = vld [vmem:[#allocation2 + $0x1f8] sm:$0xff]
    %v629 = vlaneseq
    %v630 = vshrl.u32 %v629, 7
    %v631 = vsub.s32 0, %v630
    %v632 = vrot.slane %v88, %v631
    %v633 = vlaneseq
    %v634 = vshrl.u32 %v633, 7
    %v635 = vsub.s32 1, %v634
    %v636 = vrot.slane %v88, %v635
    %v703 = vunpack.c.l.b16 %v564
    %v704 = vunpack.c.h.b16 %v564
    %v705 = vunpack.c.l.b16 %v565
    %v706 = vunpack.c.h.b16 %v565
    %v707 = vunpack.c.l.b16 %v566
    %v708 = vunpack.c.h.b16 %v566
    %v709 = vunpack.c.l.b16 %v567
    %v710 = vunpack.c.h.b16 %v567
    %v711 = vunpack.c.l.b16 %v568
    %v712 = vunpack.c.h.b16 %v568
    %v713 = vunpack.c.l.b16 %v569
    %v714 = vunpack.c.h.b16 %v569
    %v715 = vunpack.c.l.b16 %v570
    %v716 = vunpack.c.h.b16 %v570
    %v717 = vunpack.c.l.b16 %v571
    %v718 = vunpack.c.h.b16 %v571
    %v719 = vunpack.c.l.b16 %v572
    %v720 = vunpack.c.h.b16 %v572
    %v721 = vunpack.c.l.b16 %v573
    %v722 = vunpack.c.h.b16 %v573
    %v723 = vunpack.c.l.b16 %v574
    %v724 = vunpack.c.h.b16 %v574
    %v725 = vunpack.c.l.b16 %v575
    %v726 = vunpack.c.h.b16 %v575
    %v727 = vunpack.c.l.b16 %v576
    %v728 = vunpack.c.h.b16 %v576
    %v729 = vunpack.c.l.b16 %v577
    %v730 = vunpack.c.h.b16 %v577
    %v731 = vunpack.c.l.b16 %v578
    %v732 = vunpack.c.h.b16 %v578
    %v733 = vunpack.c.l.b16 %v579
    %v734 = vunpack.c.h.b16 %v579
    %v735 = vunpack.c.l.b16 %v580
    %v736 = vunpack.c.h.b16 %v580
    %v737 = vunpack.c.l.b16 %v581
    %v738 = vunpack.c.h.b16 %v581
    %v739 = vunpack.c.l.b16 %v582
    %v740 = vunpack.c.h.b16 %v582
    %v741 = vunpack.c.l.b16 %v583
    %v742 = vunpack.c.h.b16 %v583
    %v743 = vunpack.c.l.b16 %v584
    %v744 = vunpack.c.h.b16 %v584
    %v745 = vunpack.c.l.b16 %v585
    %v746 = vunpack.c.h.b16 %v585
    %v747 = vunpack.c.l.b16 %v586
    %v748 = vunpack.c.h.b16 %v586
    %v749 = vunpack.c.l.b16 %v587
    %v750 = vunpack.c.h.b16 %v587
    %v751 = vunpack.c.l.b16 %v588
    %v752 = vunpack.c.h.b16 %v588
    %v753 = vunpack.c.l.b16 %v589
    %v754 = vunpack.c.h.b16 %v589
    %v755 = vunpack.c.l.b16 %v590
    %v756 = vunpack.c.h.b16 %v590
    %v757 = vunpack.c.l.b16 %v591
    %v758 = vunpack.c.h.b16 %v591
    %v759 = vunpack.c.l.b16 %v592
    %v760 = vunpack.c.h.b16 %v592
    %v761 = vunpack.c.l.b16 %v593
    %v762 = vunpack.c.h.b16 %v593
    %v763 = vunpack.c.l.b16 %v594
    %v764 = vunpack.c.h.b16 %v594
    %v765 = vunpack.c.l.b16 %v595
    %v766 = vunpack.c.h.b16 %v595
    %v767 = vunpack.c.l.b16 %v596
    %v768 = vunpack.c.h.b16 %v596
    %v769 = vunpack.c.l.b16 %v597
    %v770 = vunpack.c.h.b16 %v597
    %v771 = vunpack.c.l.b16 %v598
    %v772 = vunpack.c.h.b16 %v598
    %v773 = vunpack.c.l.b16 %v599
    %v774 = vunpack.c.h.b16 %v599
    %v775 = vunpack.c.l.b16 %v600
    %v776 = vunpack.c.h.b16 %v600
    %v777 = vunpack.c.l.b16 %v601
    %v778 = vunpack.c.h.b16 %v601
    %v779 = vunpack.c.l.b16 %v602
    %v780 = vunpack.c.h.b16 %v602
    %v781 = vunpack.c.l.b16 %v603
    %v782 = vunpack.c.h.b16 %v603
    %v783 = vunpack.c.l.b16 %v604
    %v784 = vunpack.c.h.b16 %v604
    %v785 = vunpack.c.l.b16 %v605
    %v786 = vunpack.c.h.b16 %v605
    %v787 = vunpack.c.l.b16 %v606
    %v788 = vunpack.c.h.b16 %v606
    %v789 = vunpack.c.l.b16 %v607
    %v790 = vunpack.c.h.b16 %v607
    %v791 = vunpack.c.l.b16 %v608
    %v792 = vunpack.c.h.b16 %v608
    %v793 = vunpack.c.l.b16 %v609
    %v794 = vunpack.c.h.b16 %v609
    %v795 = vunpack.c.l.b16 %v610
    %v796 = vunpack.c.h.b16 %v610
    %v797 = vunpack.c.l.b16 %v611
    %v798 = vunpack.c.h.b16 %v611
    %v799 = vunpack.c.l.b16 %v612
    %v800 = vunpack.c.h.b16 %v612
    %v801 = vunpack.c.l.b16 %v613
    %v802 = vunpack.c.h.b16 %v613
    %v803 = vunpack.c.l.b16 %v614
    %v804 = vunpack.c.h.b16 %v614
    %v805 = vunpack.c.l.b16 %v615
    %v806 = vunpack.c.h.b16 %v615
    %v807 = vunpack.c.l.b16 %v616
    %v808 = vunpack.c.h.b16 %v616
    %v809 = vunpack.c.l.b16 %v617
    %v810 = vunpack.c.h.b16 %v617
    %v811 = vunpack.c.l.b16 %v618
    %v812 = vunpack.c.h.b16 %v618
    %v813 = vunpack.c.l.b16 %v619
    %v814 = vunpack.c.h.b16 %v619
    %v815 = vunpack.c.l.b16 %v620
    %v816 = vunpack.c.h.b16 %v620
    %v817 = vunpack.c.l.b16 %v621
    %v818 = vunpack.c.h.b16 %v621
    %v819 = vunpack.c.l.b16 %v622
    %v820 = vunpack.c.h.b16 %v622
    %v821 = vunpack.c.l.b16 %v623
    %v822 = vunpack.c.h.b16 %v623
    %v823 = vunpack.c.l.b16 %v624
    %v824 = vunpack.c.h.b16 %v624
    %v825 = vunpack.c.l.b16 %v625
    %v826 = vunpack.c.h.b16 %v625
    %v827 = vunpack.c.l.b16 %v626
    %v828 = vunpack.c.h.b16 %v626
    %v829 = vunpack.c.l.b16 %v627
    %v830 = vunpack.c.h.b16 %v627
    %v831 = vpack.c.b16 %v705, %v703
    %v832 = vpack.c.b16 %v706, %v704
    %v833 = vpack.c.b16 %v709, %v707
    %v834 = vpack.c.b16 %v710, %v708
    %v835 = vpack.c.b16 %v713, %v711
    %v836 = vpack.c.b16 %v714, %v712
    %v837 = vpack.c.b16 %v717, %v715
    %v838 = vpack.c.b16 %v718, %v716
    %v839 = vpack.c.b16 %v721, %v719
    %v840 = vpack.c.b16 %v722, %v720
    %v841 = vpack.c.b16 %v725, %v723
    %v842 = vpack.c.b16 %v726, %v724
    %v843 = vpack.c.b16 %v729, %v727
    %v844 = vpack.c.b16 %v730, %v728
    %v845 = vpack.c.b16 %v733, %v731
    %v846 = vpack.c.b16 %v734, %v732
    %v847 = vpack.c.b16 %v737, %v735
    %v848 = vpack.c.b16 %v738, %v736
    %v849 = vpack.c.b16 %v741, %v739
    %v850 = vpack.c.b16 %v742, %v740
    %v851 = vpack.c.b16 %v745, %v743
    %v852 = vpack.c.b16 %v746, %v744
    %v853 = vpack.c.b16 %v749, %v747
    %v854 = vpack.c.b16 %v750, %v748
    %v855 = vpack.c.b16 %v753, %v751
    %v856 = vpack.c.b16 %v754, %v752
    %v857 = vpack.c.b16 %v757, %v755
    %v858 = vpack.c.b16 %v758, %v756
    %v859 = vpack.c.b16 %v761, %v759
    %v860 = vpack.c.b16 %v762, %v760
    %v861 = vpack.c.b16 %v765, %v763
    %v862 = vpack.c.b16 %v766, %v764
    %v863 = vpack.c.b16 %v769, %v767
    %v864 = vpack.c.b16 %v770, %v768
    %v865 = vpack.c.b16 %v773, %v771
    %v866 = vpack.c.b16 %v774, %v772
    %v867 = vpack.c.b16 %v777, %v775
    %v868 = vpack.c.b16 %v778, %v776
    %v869 = vpack.c.b16 %v781, %v779
    %v870 = vpack.c.b16 %v782, %v780
    %v871 = vpack.c.b16 %v785, %v783
    %v872 = vpack.c.b16 %v786, %v784
    %v873 = vpack.c.b16 %v789, %v787
    %v874 = vpack.c.b16 %v790, %v788
    %v875 = vpack.c.b16 %v793, %v791
    %v876 = vpack.c.b16 %v794, %v792
    %v877 = vpack.c.b16 %v797, %v795
    %v878 = vpack.c.b16 %v798, %v796
    %v879 = vpack.c.b16 %v801, %v799
    %v880 = vpack.c.b16 %v802, %v800
    %v881 = vpack.c.b16 %v805, %v803
    %v882 = vpack.c.b16 %v806, %v804
    %v883 = vpack.c.b16 %v809, %v807
    %v884 = vpack.c.b16 %v810, %v808
    %v885 = vpack.c.b16 %v813, %v811
    %v886 = vpack.c.b16 %v814, %v812
    %v887 = vpack.c.b16 %v817, %v815
    %v888 = vpack.c.b16 %v818, %v816
    %v889 = vpack.c.b16 %v821, %v819
    %v890 = vpack.c.b16 %v822, %v820
    %v891 = vpack.c.b16 %v825, %v823
    %v892 = vpack.c.b16 %v826, %v824
    %v893 = vpack.c.b16 %v829, %v827
    %v894 = vpack.c.b16 %v830, %v828
    %959 = vmatprep.subr.bf16.mxu0 %v846
    %960 = vmatpush1.bf16.msra.mxu0 %v845
    %961 = vmatprep.subr.bf16.mxu0 %v844
    %962 = vmatpush1.bf16.msra.mxu0 %v843
    %963 = vmatprep.subr.bf16.mxu0 %v842
    %964 = vmatpush1.bf16.msra.mxu0 %v841
    %965 = vmatprep.subr.bf16.mxu0 %v840
    %966 = vmatpush1.bf16.msra.mxu0 %v839
    %967 = vmatprep.subr.bf16.mxu0 %v838
    %968 = vmatpush1.bf16.msra.mxu0 %v837
    %969 = vmatprep.subr.bf16.mxu0 %v836
    %970 = vmatpush1.bf16.msra.mxu0 %v835
    %971 = vmatprep.subr.bf16.mxu0 %v834
    %972 = vmatpush1.bf16.msra.mxu0 %v833
    %973 = vmatprep.subr.bf16.mxu0 %v832
    %974 = vmatpush1.bf16.msra.mxu0 %v831
    %975 = vmatprep.subr.bf16.mxu0 %v862
    %976 = vmatpush2.bf16.msra.mxu0 %v861
    %977 = vmatprep.subr.bf16.mxu0 %v860
    %978 = vmatpush2.bf16.msra.mxu0 %v859
    %979 = vmatprep.subr.bf16.mxu0 %v858
    %980 = vmatpush2.bf16.msra.mxu0 %v857
    %981 = vmatprep.subr.bf16.mxu0 %v856
    %982 = vmatpush2.bf16.msra.mxu0 %v855
    %983 = vmatprep.subr.bf16.mxu0 %v854
    %984 = vmatpush2.bf16.msra.mxu0 %v853
    %985 = vmatprep.subr.bf16.mxu0 %v852
    %986 = vmatpush2.bf16.msra.mxu0 %v851
    %987 = vmatprep.subr.bf16.mxu0 %v850
    %988 = vmatpush2.bf16.msra.mxu0 %v849
    %989 = vmatprep.subr.bf16.mxu0 %v848
    %990 = vmatpush2.bf16.msra.mxu0 %v847
    %991 = vmatprep.mubr.bf16.mxu0 %v561
    %992 = vmatmul.mubr.bf16.gmra.mxu0 %v560
    %v993 = vpop.f32.mrf.mxu0
    %v994 = vadd.f32 %v632, %v993
    %v995 = vpop.f32.mrf.mxu0
    %v996 = vadd.f32 %v636, %v995
    %v997 = vpop.f32.mrf.mxu0
    %v998 = vpop.f32.mrf.mxu0
    %999 = vdwg.mxu0
    %1000 = vmatprep.subr.bf16.mxu0 %v878
    %1001 = vmatpush1.bf16.msra.mxu0 %v877
    %1002 = vmatprep.subr.bf16.mxu0 %v876
    %1003 = vmatpush1.bf16.msra.mxu0 %v875
    %1004 = vmatprep.subr.bf16.mxu0 %v874
    %1005 = vmatpush1.bf16.msra.mxu0 %v873
    %1006 = vmatprep.subr.bf16.mxu0 %v872
    %1007 = vmatpush1.bf16.msra.mxu0 %v871
    %1008 = vmatprep.subr.bf16.mxu0 %v870
    %1009 = vmatpush1.bf16.msra.mxu0 %v869
    %1010 = vmatprep.subr.bf16.mxu0 %v868
    %1011 = vmatpush1.bf16.msra.mxu0 %v867
    %1012 = vmatprep.subr.bf16.mxu0 %v866
    %1013 = vmatpush1.bf16.msra.mxu0 %v865
    %1014 = vmatprep.subr.bf16.mxu0 %v864
    %1015 = vmatpush1.bf16.msra.mxu0 %v863
    %1016 = vmatprep.subr.bf16.mxu0 %v894
    %1017 = vmatpush2.bf16.msra.mxu0 %v893
    %1018 = vmatprep.subr.bf16.mxu0 %v892
    %1019 = vmatpush2.bf16.msra.mxu0 %v891
    %1020 = vmatprep.subr.bf16.mxu0 %v890
    %1021 = vmatpush2.bf16.msra.mxu0 %v889
    %1022 = vmatprep.subr.bf16.mxu0 %v888
    %1023 = vmatpush2.bf16.msra.mxu0 %v887
    %1024 = vmatprep.subr.bf16.mxu0 %v886
    %1025 = vmatpush2.bf16.msra.mxu0 %v885
    %1026 = vmatprep.subr.bf16.mxu0 %v884
    %1027 = vmatpush2.bf16.msra.mxu0 %v883
    %1028 = vmatprep.subr.bf16.mxu0 %v882
    %1029 = vmatpush2.bf16.msra.mxu0 %v881
    %1030 = vmatprep.subr.bf16.mxu0 %v880
    %1031 = vmatpush2.bf16.msra.mxu0 %v879
    %1032 = vmatprep.mubr.bf16.mxu0 %v563
    %1033 = vmatmul.mubr.bf16.gmra.mxu0 %v562
    %v1034 = vpop.f32.mrf.mxu0
    %v1035 = vadd.f32 %v994, %v1034
    %v1036 = vpop.f32.mrf.mxu0
    %v1037 = vadd.f32 %v996, %v1036
    %v1038 = vpop.f32.mrf.mxu0
    %v1039 = vpop.f32.mrf.mxu0
    %1040 = vdwg.mxu0
    %vm1041 = vcmp.ge.f32.partialorder %v1035, 0.0
    %vm1042 = vcmp.ge.f32.partialorder %v1037, 0.0
    %v1044 = vlaneseq
    %v1045 = vshrl.u32 %v1044, 7
    %v1046 = vsub.s32 0, %v1045
    %v1047 = vrot.slane %v93, %v1046
    %v1048 = vlaneseq
    %v1049 = vshrl.u32 %v1048, 7
    %v1050 = vsub.s32 1, %v1049
    %v1051 = vrot.slane %v93, %v1050
    %v1054 = vmul.f32 %v1047, %v1035
    %v1055 = vmul.f32 %v1051, %v1037
    %v1056 = vsel %vm1041, %v1035, %v1054
    %v1057 = vsel %vm1042, %v1037, %v1055
    %v1058 = vpack.c.bf16 %v1056, %v1056
    %v1059 = vpack.c.bf16 %v1057, %v1057
    %v1060 = vld [vmem:[#allocation5] sm:$0xf]
    %v1061 = vld [vmem:[#allocation5 + $0x4] sm:$0xf]
    %v1062 = vld [vmem:[#allocation5 + $0x8] sm:$0xf]
    %v1063 = vld [vmem:[#allocation5 + $0xc] sm:$0xf]
    %v1064 = vld [vmem:[#allocation5 + $0x10] sm:$0xf]
    %v1065 = vld [vmem:[#allocation5 + $0x14] sm:$0xf]
    %v1066 = vld [vmem:[#allocation5 + $0x18] sm:$0xf]
    %v1067 = vld [vmem:[#allocation5 + $0x1c] sm:$0xf]
    %v1068 = vld [vmem:[#allocation5 + $0x20] sm:$0xf]
    %v1069 = vld [vmem:[#allocation5 + $0x24] sm:$0xf]
    %v1070 = vld [vmem:[#allocation5 + $0x28] sm:$0xf]
    %v1071 = vld [vmem:[#allocation5 + $0x2c] sm:$0xf]
    %v1072 = vld [vmem:[#allocation5 + $0x30] sm:$0xf]
    %v1073 = vld [vmem:[#allocation5 + $0x34] sm:$0xf]
    %v1074 = vld [vmem:[#allocation5 + $0x38] sm:$0xf]
    %v1075 = vld [vmem:[#allocation5 + $0x3c] sm:$0xf]
    %v1076 = vld [vmem:[#allocation5 + $0x40] sm:$0xf]
    %v1077 = vld [vmem:[#allocation5 + $0x44] sm:$0xf]
    %v1078 = vld [vmem:[#allocation5 + $0x48] sm:$0xf]
    %v1079 = vld [vmem:[#allocation5 + $0x4c] sm:$0xf]
    %v1080 = vld [vmem:[#allocation5 + $0x50] sm:$0xf]
    %v1081 = vld [vmem:[#allocation5 + $0x54] sm:$0xf]
    %v1082 = vld [vmem:[#allocation5 + $0x58] sm:$0xf]
    %v1083 = vld [vmem:[#allocation5 + $0x5c] sm:$0xf]
    %v1084 = vld [vmem:[#allocation5 + $0x60] sm:$0xf]
    %v1085 = vld [vmem:[#allocation5 + $0x64] sm:$0xf]
    %v1086 = vld [vmem:[#allocation5 + $0x68] sm:$0xf]
    %v1087 = vld [vmem:[#allocation5 + $0x6c] sm:$0xf]
    %v1088 = vld [vmem:[#allocation5 + $0x70] sm:$0xf]
    %v1089 = vld [vmem:[#allocation5 + $0x74] sm:$0xf]
    %v1090 = vld [vmem:[#allocation5 + $0x78] sm:$0xf]
    %v1091 = vld [vmem:[#allocation5 + $0x7c] sm:$0xf]
    %v1124 = vunpack.c.l.b16 %v1060
    %v1125 = vunpack.c.l.b16 %v1061
    %v1126 = vunpack.c.l.b16 %v1062
    %v1127 = vunpack.c.l.b16 %v1063
    %v1128 = vunpack.c.l.b16 %v1064
    %v1129 = vunpack.c.l.b16 %v1065
    %v1130 = vunpack.c.l.b16 %v1066
    %v1131 = vunpack.c.l.b16 %v1067
    %v1132 = vunpack.c.l.b16 %v1068
    %v1133 = vunpack.c.l.b16 %v1069
    %v1134 = vunpack.c.l.b16 %v1070
    %v1135 = vunpack.c.l.b16 %v1071
    %v1136 = vunpack.c.l.b16 %v1072
    %v1137 = vunpack.c.l.b16 %v1073
    %v1138 = vunpack.c.l.b16 %v1074
    %v1139 = vunpack.c.l.b16 %v1075
    %v1140 = vunpack.c.l.b16 %v1076
    %v1141 = vunpack.c.l.b16 %v1077
    %v1142 = vunpack.c.l.b16 %v1078
    %v1143 = vunpack.c.l.b16 %v1079
    %v1144 = vunpack.c.l.b16 %v1080
    %v1145 = vunpack.c.l.b16 %v1081
    %v1146 = vunpack.c.l.b16 %v1082
    %v1147 = vunpack.c.l.b16 %v1083
    %v1148 = vunpack.c.l.b16 %v1084
    %v1149 = vunpack.c.l.b16 %v1085
    %v1150 = vunpack.c.l.b16 %v1086
    %v1151 = vunpack.c.l.b16 %v1087
    %v1152 = vunpack.c.l.b16 %v1088
    %v1153 = vunpack.c.l.b16 %v1089
    %v1154 = vunpack.c.l.b16 %v1090
    %v1155 = vunpack.c.l.b16 %v1091
    %v1156 = vpack.c.b16 %v1125, %v1124
    %v1157 = vpack.c.b16 %v1127, %v1126
    %v1158 = vpack.c.b16 %v1129, %v1128
    %v1159 = vpack.c.b16 %v1131, %v1130
    %v1160 = vpack.c.b16 %v1133, %v1132
    %v1161 = vpack.c.b16 %v1135, %v1134
    %v1162 = vpack.c.b16 %v1137, %v1136
    %v1163 = vpack.c.b16 %v1139, %v1138
    %v1164 = vpack.c.b16 %v1141, %v1140
    %v1165 = vpack.c.b16 %v1143, %v1142
    %v1166 = vpack.c.b16 %v1145, %v1144
    %v1167 = vpack.c.b16 %v1147, %v1146
    %v1168 = vpack.c.b16 %v1149, %v1148
    %v1169 = vpack.c.b16 %v1151, %v1150
    %v1170 = vpack.c.b16 %v1153, %v1152
    %v1171 = vpack.c.b16 %v1155, %v1154
    %1188 = vmatprep.subr.bf16.mxu0 0
    %1189 = vmatpush1.bf16.msra.mxu0 %v1163
    %1190 = vmatprep.subr.bf16.mxu0 0
    %1191 = vmatpush1.bf16.msra.mxu0 %v1162
    %1192 = vmatprep.subr.bf16.mxu0 0
    %1193 = vmatpush1.bf16.msra.mxu0 %v1161
    %1194 = vmatprep.subr.bf16.mxu0 0
    %1195 = vmatpush1.bf16.msra.mxu0 %v1160
    %1196 = vmatprep.subr.bf16.mxu0 0
    %1197 = vmatpush1.bf16.msra.mxu0 %v1159
    %1198 = vmatprep.subr.bf16.mxu0 0
    %1199 = vmatpush1.bf16.msra.mxu0 %v1158
    %1200 = vmatprep.subr.bf16.mxu0 0
    %1201 = vmatpush1.bf16.msra.mxu0 %v1157
    %1202 = vmatprep.subr.bf16.mxu0 0
    %1203 = vmatpush1.bf16.msra.mxu0 %v1156
    %1204 = vmatprep.subr.bf16.mxu0 0
    %1205 = vmatpush2.bf16.msra.mxu0 %v1171
    %1206 = vmatprep.subr.bf16.mxu0 0
    %1207 = vmatpush2.bf16.msra.mxu0 %v1170
    %1208 = vmatprep.subr.bf16.mxu0 0
    %1209 = vmatpush2.bf16.msra.mxu0 %v1169
    %1210 = vmatprep.subr.bf16.mxu0 0
    %1211 = vmatpush2.bf16.msra.mxu0 %v1168
    %1212 = vmatprep.subr.bf16.mxu0 0
    %1213 = vmatpush2.bf16.msra.mxu0 %v1167
    %1214 = vmatprep.subr.bf16.mxu0 0
    %1215 = vmatpush2.bf16.msra.mxu0 %v1166
    %1216 = vmatprep.subr.bf16.mxu0 0
    %1217 = vmatpush2.bf16.msra.mxu0 %v1165
    %1218 = vmatprep.subr.bf16.mxu0 0
    %1219 = vmatpush2.bf16.msra.mxu0 %v1164
    %1220 = vmatprep.mubr.bf16.mxu0 %v1059
    %1221 = vmatmul.mubr.bf16.gmra.mxu0 %v1058
    %v1222 = vpop.f32.mrf.mxu0
    %v1223 = vadd.f32 %v89, %v1222
    %v1224 = vpop.f32.mrf.mxu0
    %v1225 = vpop.f32.mrf.mxu0
    %v1226 = vpop.f32.mrf.mxu0
    %1227 = vdwg.mxu0
    %v1228 = vmul.f32 %v1223, %v90
    %1229 = vmatprep.subr.mxu0 0.0
    %1230 = vmatpush1.xpose.msra.mxu0 %v109
    %1231 = vmatprep.subr.mxu0 0.0
    %1232 = vmatpush1.xpose.msra.mxu0 %v108
    %1233 = vmatprep.subr.mxu0 0.0
    %1234 = vmatpush1.xpose.msra.mxu0 %v107
    %1235 = vmatprep.subr.mxu0 0.0
    %1236 = vmatpush1.xpose.msra.mxu0 %v106
    %1237 = vmatprep.subr.mxu0 0.0
    %1238 = vmatpush1.xpose.msra.mxu0 %v105
    %1239 = vmatprep.subr.mxu0 0.0
    %1240 = vmatpush1.xpose.msra.mxu0 %v104
    %1241 = vmatprep.subr.mxu0 0.0
    %1242 = vmatpush1.xpose.msra.mxu0 %v103
    %1243 = vmatprep.subr.mxu0 0.0
    %1244 = vmatpush1.xpose.msra.mxu0 %v102
    %1245 = vmatprep.subr.mxu0 0.0
    %1246 = vmatpush1.xpose.msra.mxu0 %v101
    %1247 = vmatprep.subr.mxu0 0.0
    %1248 = vmatpush1.xpose.msra.mxu0 %v100
    %1249 = vmatprep.subr.mxu0 0.0
    %1250 = vmatpush1.xpose.msra.mxu0 %v99
    %1251 = vmatprep.subr.mxu0 0.0
    %1252 = vmatpush1.xpose.msra.mxu0 %v98
    %1253 = vmatprep.subr.mxu0 0.0
    %1254 = vmatpush1.xpose.msra.mxu0 %v97
    %1255 = vmatprep.subr.mxu0 0.0
    %1256 = vmatpush1.xpose.msra.mxu0 %v96
    %1257 = vmatprep.subr.mxu0 0.0
    %1258 = vmatpush1.xpose.msra.mxu0 %v95
    %1259 = vmatprep.subr.mxu0 0.0
    %1260 = vmatpush1.xpose.msra.mxu0 %v94
    %1261 = vmatprep.subr.mxu0 0.0
    %1262 = vmatpush2.xpose.msra.mxu0 0.0
    %1263 = vmatprep.subr.mxu0 0.0
    %1264 = vmatpush2.xpose.msra.mxu0 0.0
    %1265 = vmatprep.subr.mxu0 0.0
    %1266 = vmatpush2.xpose.msra.mxu0 0.0
    %1267 = vmatprep.subr.mxu0 0.0
    %1268 = vmatpush2.xpose.msra.mxu0 0.0
    %1269 = vmatprep.subr.mxu0 0.0
    %1270 = vmatpush2.xpose.msra.mxu0 0.0
    %1271 = vmatprep.subr.mxu0 0.0
    %1272 = vmatpush2.xpose.msra.mxu0 0.0
    %1273 = vmatprep.subr.mxu0 0.0
    %1274 = vmatpush2.xpose.msra.mxu0 0.0
    %1275 = vmatprep.subr.mxu0 0.0
    %1276 = vmatpush2.xpose.msra.mxu0 0.0
    %1277 = vmatprep.subr.mxu0 0.0
    %1278 = vmatpush2.xpose.msra.mxu0 0.0
    %1279 = vmatprep.subr.mxu0 0.0
    %1280 = vmatpush2.xpose.msra.mxu0 0.0
    %1281 = vmatprep.subr.mxu0 0.0
    %1282 = vmatpush2.xpose.msra.mxu0 0.0
    %1283 = vmatprep.subr.mxu0 0.0
    %1284 = vmatpush2.xpose.msra.mxu0 0.0
    %1285 = vmatprep.subr.mxu0 0.0
    %1286 = vmatpush2.xpose.msra.mxu0 0.0
    %1287 = vmatprep.subr.mxu0 0.0
    %1288 = vmatpush2.xpose.msra.mxu0 0.0
    %1289 = vmatprep.subr.mxu0 0.0
    %1290 = vmatpush2.xpose.msra.mxu0 0.0
    %1291 = vmatprep.subr.mxu0 0.0
    %1292 = vmatpush2.xpose.msra.mxu0 0.0
    %1293 = vmatprep.mubr.f32.mxu0 0.0
    %1294 = vmatmul.mubr.f32.gmra.mxu0 %v1228
    %v1295 = vpop.f32.mrf.mxu0
    %v1296 = vadd.f32 0.0, %v1295
    %v1297 = vpop.f32.mrf.mxu0
    %1298 = vdwg.mxu0
    %1299 = vmatprep.subr.mxu0 0.0
    %1300 = vmatpush1.xpose.msra.mxu0 0.0
    %1301 = vmatprep.subr.mxu0 0.0
    %1302 = vmatpush1.xpose.msra.mxu0 0.0
    %1303 = vmatprep.subr.mxu0 0.0
    %1304 = vmatpush1.xpose.msra.mxu0 0.0
    %1305 = vmatprep.subr.mxu0 0.0
    %1306 = vmatpush1.xpose.msra.mxu0 0.0
    %1307 = vmatprep.subr.mxu0 0.0
    %1308 = vmatpush1.xpose.msra.mxu0 0.0
    %1309 = vmatprep.subr.mxu0 0.0
    %1310 = vmatpush1.xpose.msra.mxu0 0.0
    %1311 = vmatprep.subr.mxu0 0.0
    %1312 = vmatpush1.xpose.msra.mxu0 0.0
    %1313 = vmatprep.subr.mxu0 0.0
    %1314 = vmatpush1.xpose.msra.mxu0 0.0
    %1315 = vmatprep.subr.mxu0 0.0
    %1316 = vmatpush1.xpose.msra.mxu0 0.0
    %1317 = vmatprep.subr.mxu0 0.0
    %1318 = vmatpush1.xpose.msra.mxu0 0.0
    %1319 = vmatprep.subr.mxu0 0.0
    %1320 = vmatpush1.xpose.msra.mxu0 0.0
    %1321 = vmatprep.subr.mxu0 0.0
    %1322 = vmatpush1.xpose.msra.mxu0 0.0
    %1323 = vmatprep.subr.mxu0 0.0
    %1324 = vmatpush1.xpose.msra.mxu0 0.0
    %1325 = vmatprep.subr.mxu0 0.0
    %1326 = vmatpush1.xpose.msra.mxu0 0.0
    %1327 = vmatprep.subr.mxu0 0.0
    %1328 = vmatpush1.xpose.msra.mxu0 0.0
    %1329 = vmatprep.subr.mxu0 0.0
    %1330 = vmatpush1.xpose.msra.mxu0 %v1228
    %1331 = vmatprep.subr.mxu0 0.0
    %1332 = vmatpush2.xpose.msra.mxu0 0.0
    %1333 = vmatprep.subr.mxu0 0.0
    %1334 = vmatpush2.xpose.msra.mxu0 0.0
    %1335 = vmatprep.subr.mxu0 0.0
    %1336 = vmatpush2.xpose.msra.mxu0 0.0
    %1337 = vmatprep.subr.mxu0 0.0
    %1338 = vmatpush2.xpose.msra.mxu0 0.0
    %1339 = vmatprep.subr.mxu0 0.0
    %1340 = vmatpush2.xpose.msra.mxu0 0.0
    %1341 = vmatprep.subr.mxu0 0.0
    %1342 = vmatpush2.xpose.msra.mxu0 0.0
    %1343 = vmatprep.subr.mxu0 0.0
    %1344 = vmatpush2.xpose.msra.mxu0 0.0
    %1345 = vmatprep.subr.mxu0 0.0
    %1346 = vmatpush2.xpose.msra.mxu0 0.0
    %1347 = vmatprep.subr.mxu0 0.0
    %1348 = vmatpush2.xpose.msra.mxu0 0.0
    %1349 = vmatprep.subr.mxu0 0.0
    %1350 = vmatpush2.xpose.msra.mxu0 0.0
    %1351 = vmatprep.subr.mxu0 0.0
    %1352 = vmatpush2.xpose.msra.mxu0 0.0
    %1353 = vmatprep.subr.mxu0 0.0
    %1354 = vmatpush2.xpose.msra.mxu0 0.0
    %1355 = vmatprep.subr.mxu0 0.0
    %1356 = vmatpush2.xpose.msra.mxu0 0.0
    %1357 = vmatprep.subr.mxu0 0.0
    %1358 = vmatpush2.xpose.msra.mxu0 0.0
    %1359 = vmatprep.subr.mxu0 0.0
    %1360 = vmatpush2.xpose.msra.mxu0 0.0
    %1361 = vmatprep.subr.mxu0 0.0
    %1362 = vmatpush2.xpose.msra.mxu0 0.0
    %1363 = vmatprep.mubr.f32.mxu0 0.0
    %1364 = vmatmul.mubr.f32.gmra.mxu0 %v1228
    %v1365 = vpop.f32.mrf.mxu0
    %v1366 = vadd.f32 0.0, %v1365
    %v1367 = vpop.f32.mrf.mxu0
    %1368 = vdwg.mxu0
    %vm1369 = vcmp.eq.s32.totalorder %v297, %v299
    %v1370 = vsel %vm1369, %v1366, 0.0
    %vm1371 = vcmask 64512
    %v1372 = vsel %vm1371, %v1370, 0.0
    %1373 = vadd.xlane.f32.xlu0 %v1372
    %v1374 = vpop.xlane.xlu0 %1373
    %v1375 = vrot.slane %v1372, 4
    %v1376 = vadd.f32 %v1372, %v1375
    %v1377 = vrot.slane %v1376, 2
    %v1378 = vadd.f32 %v1376, %v1377
    %v1379 = vrot.slane %v1378, 1
    %v1380 = vadd.f32 %v1378, %v1379
    %v1381 = vadd.f32 %v1374, %v91
    %v1382 = vmul.f32 %v1296, 2.0
    %v1383 = vsub.f32 %v1381, %v1382
    %v1384 = vmax.f32 %v1383, 0.0
    %v1385 = vmul.f32 %v1384, -0.5
    %v1386 = vmul.f32 %v1385, 1.442695
    %v1387 = vpow.pop %v1386
    %v1388 = vmul.f32 %v1387, 0.6931472
    %v1389 = vadd.f32 %v1374, %v1380
    %v1390 = vmul.f32 %v1366, 2.0
    %v1391 = vsub.f32 %v1389, %v1390
    %v1392 = vmax.f32 %v1391, 0.0
    %v1393 = vsel %vm1369, 0.0, %v1392
    %v1394 = vmul.f32 %v1393, -0.5
    %v1395 = vmul.f32 %v1394, 1.442695
    %v1396 = vpow.pop %v1395
    %v1397 = vmul.f32 %v1396, 0.6931472
    %1398 = vmatprep.subr.mxu0 0.0
    %1399 = vmatpush1.msra.mxu0 %v125
    %1400 = vmatprep.subr.mxu0 0.0
    %1401 = vmatpush1.msra.mxu0 %v124
    %1402 = vmatprep.subr.mxu0 0.0
    %1403 = vmatpush1.msra.mxu0 %v123
    %1404 = vmatprep.subr.mxu0 0.0
    %1405 = vmatpush1.msra.mxu0 %v122
    %1406 = vmatprep.subr.mxu0 0.0
    %1407 = vmatpush1.msra.mxu0 %v121
    %1408 = vmatprep.subr.mxu0 0.0
    %1409 = vmatpush1.msra.mxu0 %v120
    %1410 = vmatprep.subr.mxu0 0.0
    %1411 = vmatpush1.msra.mxu0 %v119
    %1412 = vmatprep.subr.mxu0 0.0
    %1413 = vmatpush1.msra.mxu0 %v118
    %1414 = vmatprep.subr.mxu0 0.0
    %1415 = vmatpush1.msra.mxu0 %v117
    %1416 = vmatprep.subr.mxu0 0.0
    %1417 = vmatpush1.msra.mxu0 %v116
    %1418 = vmatprep.subr.mxu0 0.0
    %1419 = vmatpush1.msra.mxu0 %v115
    %1420 = vmatprep.subr.mxu0 0.0
    %1421 = vmatpush1.msra.mxu0 %v114
    %1422 = vmatprep.subr.mxu0 0.0
    %1423 = vmatpush1.msra.mxu0 %v113
    %1424 = vmatprep.subr.mxu0 0.0
    %1425 = vmatpush1.msra.mxu0 %v112
    %1426 = vmatprep.subr.mxu0 0.0
    %1427 = vmatpush1.msra.mxu0 %v111
    %1428 = vmatprep.subr.mxu0 0.0
    %1429 = vmatpush1.msra.mxu0 %v110
    %1430 = vmatprep.subr.mxu0 0.0
    %1431 = vmatpush2.msra.mxu0 0.0
    %1432 = vmatprep.subr.mxu0 0.0
    %1433 = vmatpush2.msra.mxu0 0.0
    %1434 = vmatprep.subr.mxu0 0.0
    %1435 = vmatpush2.msra.mxu0 0.0
    %1436 = vmatprep.subr.mxu0 0.0
    %1437 = vmatpush2.msra.mxu0 0.0
    %1438 = vmatprep.subr.mxu0 0.0
    %1439 = vmatpush2.msra.mxu0 0.0
    %1440 = vmatprep.subr.mxu0 0.0
    %1441 = vmatpush2.msra.mxu0 0.0
    %1442 = vmatprep.subr.mxu0 0.0
    %1443 = vmatpush2.msra.mxu0 0.0
    %1444 = vmatprep.subr.mxu0 0.0
    %1445 = vmatpush2.msra.mxu0 0.0
    %1446 = vmatprep.subr.mxu0 0.0
    %1447 = vmatpush2.msra.mxu0 0.0
    %1448 = vmatprep.subr.mxu0 0.0
    %1449 = vmatpush2.msra.mxu0 0.0
    %1450 = vmatprep.subr.mxu0 0.0
    %1451 = vmatpush2.msra.mxu0 0.0
    %1452 = vmatprep.subr.mxu0 0.0
    %1453 = vmatpush2.msra.mxu0 0.0
    %1454 = vmatprep.subr.mxu0 0.0
    %1455 = vmatpush2.msra.mxu0 0.0
    %1456 = vmatprep.subr.mxu0 0.0
    %1457 = vmatpush2.msra.mxu0 0.0
    %1458 = vmatprep.subr.mxu0 0.0
    %1459 = vmatpush2.msra.mxu0 0.0
    %1460 = vmatprep.subr.mxu0 0.0
    %1461 = vmatpush2.msra.mxu0 0.0
    %1462 = vmatprep.mubr.f32.mxu0 0.0
    %1463 = vmatmul.mubr.f32.gmra.mxu0 %v1388
    %v1464 = vpop.f32.mrf.mxu0
    %v1465 = vadd.f32 0.0, %v1464
    %v1466 = vpop.f32.mrf.mxu0
    %1467 = vdwg.mxu0
    %v1468 = vadd.f32 %v1465, 0.0
    %1469 = vst [vmem:[#allocation10] sm:$0xff] %v1468
    %1470 = vmatprep.subr.mxu0 0.0
    %1471 = vmatpush1.xpose.msra.mxu0 0.0
    %1472 = vmatprep.subr.mxu0 0.0
    %1473 = vmatpush1.xpose.msra.mxu0 0.0
    %1474 = vmatprep.subr.mxu0 0.0
    %1475 = vmatpush1.xpose.msra.mxu0 0.0
    %1476 = vmatprep.subr.mxu0 0.0
    %1477 = vmatpush1.xpose.msra.mxu0 0.0
    %1478 = vmatprep.subr.mxu0 0.0
    %1479 = vmatpush1.xpose.msra.mxu0 0.0
    %1480 = vmatprep.subr.mxu0 0.0
    %1481 = vmatpush1.xpose.msra.mxu0 0.0
    %1482 = vmatprep.subr.mxu0 0.0
    %1483 = vmatpush1.xpose.msra.mxu0 0.0
    %1484 = vmatprep.subr.mxu0 0.0
    %1485 = vmatpush1.xpose.msra.mxu0 0.0
    %1486 = vmatprep.subr.mxu0 0.0
    %1487 = vmatpush1.xpose.msra.mxu0 0.0
    %1488 = vmatprep.subr.mxu0 0.0
    %1489 = vmatpush1.xpose.msra.mxu0 0.0
    %1490 = vmatprep.subr.mxu0 0.0
    %1491 = vmatpush1.xpose.msra.mxu0 0.0
    %1492 = vmatprep.subr.mxu0 0.0
    %1493 = vmatpush1.xpose.msra.mxu0 0.0
    %1494 = vmatprep.subr.mxu0 0.0
    %1495 = vmatpush1.xpose.msra.mxu0 0.0
    %1496 = vmatprep.subr.mxu0 0.0
    %1497 = vmatpush1.xpose.msra.mxu0 0.0
    %1498 = vmatprep.subr.mxu0 0.0
    %1499 = vmatpush1.xpose.msra.mxu0 0.0
    %1500 = vmatprep.subr.mxu0 0.0
    %1501 = vmatpush1.xpose.msra.mxu0 %v1388
    %1502 = vmatprep.subr.mxu0 0.0
    %1503 = vmatpush2.xpose.msra.mxu0 0.0
    %1504 = vmatprep.subr.mxu0 0.0
    %1505 = vmatpush2.xpose.msra.mxu0 0.0
    %1506 = vmatprep.subr.mxu0 0.0
    %1507 = vmatpush2.xpose.msra.mxu0 0.0
    %1508 = vmatprep.subr.mxu0 0.0
    %1509 = vmatpush2.xpose.msra.mxu0 0.0
    %1510 = vmatprep.subr.mxu0 0.0
    %1511 = vmatpush2.xpose.msra.mxu0 0.0
    %1512 = vmatprep.subr.mxu0 0.0
    %1513 = vmatpush2.xpose.msra.mxu0 0.0
    %1514 = vmatprep.subr.mxu0 0.0
    %1515 = vmatpush2.xpose.msra.mxu0 0.0
    %1516 = vmatprep.subr.mxu0 0.0
    %1517 = vmatpush2.xpose.msra.mxu0 0.0
    %1518 = vmatprep.subr.mxu0 0.0
    %1519 = vmatpush2.xpose.msra.mxu0 0.0
    %1520 = vmatprep.subr.mxu0 0.0
    %1521 = vmatpush2.xpose.msra.mxu0 0.0
    %1522 = vmatprep.subr.mxu0 0.0
    %1523 = vmatpush2.xpose.msra.mxu0 0.0
    %1524 = vmatprep.subr.mxu0 0.0
    %1525 = vmatpush2.xpose.msra.mxu0 0.0
    %1526 = vmatprep.subr.mxu0 0.0
    %1527 = vmatpush2.xpose.msra.mxu0 0.0
    %1528 = vmatprep.subr.mxu0 0.0
    %1529 = vmatpush2.xpose.msra.mxu0 0.0
    %1530 = vmatprep.subr.mxu0 0.0
    %1531 = vmatpush2.xpose.msra.mxu0 0.0
    %1532 = vmatprep.subr.mxu0 0.0
    %1533 = vmatpush2.xpose.msra.mxu0 0.0
    %1534 = vmatprep.mubr.f32.mxu0 0.0
    %1535 = vmatmul.mubr.f32.gmra.mxu0 %v1465
    %v1536 = vpop.f32.mrf.mxu0
    %v1537 = vadd.f32 0.0, %v1536
    %v1538 = vpop.f32.mrf.mxu0
    %1539 = vdwg.mxu0
    %v1540 = vsub.f32 %v1397, %v1537
    %v1541 = vsel %vm1369, 1, 0
    %v1542 = vcvt.s32.f32 %v1541
    %v1543 = vmul.f32 %v1542, 0.6932472
    %v1544 = vadd.f32 %v1540, %v1543
    %1545 = vst.msk [vmem:[#allocation11] sm:$0xff] %vm1371, %v1544
    // Predicated region
    $region46: #{tpu_custom_call.1} parent=1 // pred_check
      _
    $region47: #{tpu_custom_call.1} parent=1 // pred_check_branch
      %1547 = sbr.rel (0) target = $region49
    $region48: #{tpu_custom_call.1} parent=1 // pred_region
      %s1549 = ssub.s32 128, 128
      %1550 = vsyncadd [#allocation4], %s1549
      %s1552 = sshll.u32 [#allocation10], 4
      %s1553 = int_to_ptr.vmem [resolvable:$true] %s1552
      %1555 = dma.vmem_to_hbm [thread:$0]  %s1553, 128, %s7, [#allocation4]
    $region49: #{tpu_custom_call.1} parent=1 // pred_fallthru
      _
    // Predicated region
    $region50: #{tpu_custom_call.1} parent=1 // pred_check
      _
    $region51: #{tpu_custom_call.1} parent=1 // pred_check_branch
      %1557 = sbr.rel (0) target = $region53
    $region52: #{tpu_custom_call.1} parent=1 // pred_region
      %s1559 = ssub.s32 128, 128
      %1560 = vsyncadd [#allocation12], %s1559
      %s1562 = sshll.u32 [#allocation11], 4
      %s1563 = int_to_ptr.vmem [resolvable:$true] %s1562
      %1565 = dma.vmem_to_hbm [thread:$0]  %s1563, 128, %s8, [#allocation12]
    $region53: #{tpu_custom_call.1} parent=1 // pred_fallthru
      _
    // Predicated region
    $region54: #{tpu_custom_call.1} parent=1 // pred_check
      _
    $region55: #{tpu_custom_call.1} parent=1 // pred_check_branch
      %1567 = sbr.rel (0) target = $region57
    $region56: #{tpu_custom_call.1} parent=1 // pred_region
      %1568 = dma.done [#allocation4], 128
    $region57: #{tpu_custom_call.1} parent=1 // pred_fallthru
      _
    // Predicated region
    $region58: #{tpu_custom_call.1} parent=1 // pred_check
      _
    $region59: #{tpu_custom_call.1} parent=1 // pred_check_branch
      %1570 = sbr.rel (0) target = $region61
    $region60: #{tpu_custom_call.1} parent=1 // pred_region
      %1571 = dma.done [#allocation12], 128
    $region61: #{tpu_custom_call.1} parent=1 // pred_fallthru
      _
    %1572 = vsyncpa [#allocation3], 1
    %1573 = vsyncpa [#allocation6], 1
    %1574 = vsyncpa [#allocation9], 1
    %1575 = vsyncpa [#allocation4], 1
    %1576 = vsyncpa [#allocation12], 1

</llo_original>
